<compile_context>
chip_gen: v7x
topology: tpu7x:2x2x1
jax: 0.10.0
libtpu: 0.0.40
codegen_flags: <defaults>
</compile_context>

<pallas_src>
import numpy as np
import jax
import jax.numpy as jnp
from jax.experimental import pallas as pl
from jax.experimental.pallas import tpu as pltpu

OUT_PAD = 128  # lane-dense padding of the final Linear output


def _cdiv(a, b):
    return -(-a // b)


# ----------------------------- kernel helpers ------------------------------

def _taps(h, L):
    """h_prev[i] = h[i-1], h_next[i] = h[i+1], zeroed at per-sequence boundaries.

    h: (N, C) with N = batch_tile * L; rows of each sequence are contiguous.
    """
    N = h.shape[0]
    zero_row = jnp.zeros_like(h[:1])
    h_prev = jnp.concatenate([zero_row, h[:-1]], axis=0)       # h[i-1]
    h_next = jnp.concatenate([h[1:], zero_row], axis=0)        # h[i+1]
    pos = jax.lax.broadcasted_iota(jnp.int32, (N, 1), 0) % L   # position within sequence
    h_prev = jnp.where(pos > 0, h_prev, 0.0)                   # mask cross-sequence leak
    h_next = jnp.where(pos < L - 1, h_next, 0.0)
    return h_prev, h_next


def _conv3_small(x, L, w_ref, b_ref):
    """Layer-1 'same' Conv1d(k=3): three small K=c_in f32 dots summed.

    Avoids the lane-sparse im2col concat (K = 3*c_in is tiny); layer-1 folded-BN
    weights stay f32 so small running_var does not blow up bf16 rounding.
    w_ref: (3, c_in, 64) f32, taps ordered [x[l-1], x[l], x[l+1]].  b_ref: (1, 64) f32.
    """
    x_prev, x_next = _taps(x, L)
    y = (jnp.dot(x_prev, w_ref[0], preferred_element_type=jnp.float32)
         + jnp.dot(x, w_ref[1], preferred_element_type=jnp.float32)
         + jnp.dot(x_next, w_ref[2], preferred_element_type=jnp.float32))
    return y + b_ref[...]


def _conv3_im2col(h, L, w, b):
    """Layers 2/3: fused 'same' Conv1d(k=3) as one MXU dot on a bf16 im2col slab.

    h: (N, Cin) bf16.  w: (3*Cin, Cout) bf16, rows [tap x[l-1] | x[l] | x[l+1]].
    """
    h_prev, h_next = _taps(h, L)
    im2col = jnp.concatenate([h_prev, h, h_next], axis=1)      # (N, 3*Cin) bf16
    return jnp.dot(im2col, w, preferred_element_type=jnp.float32) + b


def _maxpool2(h):
    """MaxPool1d(kernel=2, stride=2) along the sequence axis: pairwise row max.

    No VMEM staging round trip (pure value-side sublane shuffle + max).
    """
    N, C = h.shape
    return jnp.max(h.reshape(N // 2, 2, C), axis=1)


# --------------------------------- kernel ----------------------------------

def forecaster_kernel(x_ref, w1_ref, b1_ref, w2_ref, b2_ref, w3_ref, b3_ref,
                      fw1_ref, fb1_ref, fw2_ref, fb2_ref, fw3_ref, fb3_ref,
                      pmat_ref, o_ref):
    bt, L, c_in = x_ref.shape
    N = bt * L
    x = x_ref[...].reshape(N, c_in)                            # f32; sequences contiguous

    # block 1: Conv(c_in,64) + BN(folded) + ReLU + MaxPool(2) + Dropout(identity)
    h = _conv3_small(x, L, w1_ref, b1_ref)                     # (N, 64) f32
    h = _maxpool2(jnp.maximum(h, 0.0).astype(jnp.bfloat16))    # (N/2, 64) bf16

    # block 2: Conv(64,128) + BN(folded) + ReLU + MaxPool(2) + Dropout(identity)
    h = _conv3_im2col(h, L // 2, w2_ref[...], b2_ref[...])     # (N/2, 128) f32
    h = _maxpool2(jnp.maximum(h, 0.0).astype(jnp.bfloat16))    # (N/4, 128) bf16

    # block 3: Conv(128,256) + BN(folded) + ReLU
    h = _conv3_im2col(h, L // 4, w3_ref[...], b3_ref[...])     # (N/4, 256) f32
    h = jnp.maximum(h, 0.0).astype(jnp.bfloat16)               # (N/4, 256) bf16

    # AdaptiveAvgPool1d(1): hoisted 0/1 bf16 selector matmul + exact 1/L4 scale (f32)
    h = jnp.dot(pmat_ref[...], h, preferred_element_type=jnp.float32) * (1.0 / (L // 4))

    # fc head: 256->128 ReLU, 128->64 ReLU, 64->OUT_PAD (Dropout = identity, eval)
    h = jnp.maximum(jnp.dot(h.astype(jnp.bfloat16), fw1_ref[...],
                            preferred_element_type=jnp.float32) + fb1_ref[...], 0.0)
    h = jnp.maximum(jnp.dot(h.astype(jnp.bfloat16), fw2_ref[...],
                            preferred_element_type=jnp.float32) + fb2_ref[...], 0.0)
    out = jnp.dot(h.astype(jnp.bfloat16), fw3_ref[...],
                  preferred_element_type=jnp.float32) + fb3_ref[...]
    o_ref[0] = out.astype(o_ref.dtype)                         # (bt, OUT_PAD), lane-dense


# ------------------------------ wrapper utils -------------------------------

def _padded_bytes(shape, itemsize):
    """(8,128)-tile-padded byte footprint of one VMEM buffer of this shape."""
    shape = tuple(int(d) for d in shape)
    if len(shape) == 1:
        shape = (1,) + shape
    lead = 1
    for d in shape[:-2]:
        lead *= d
    sub = _cdiv(shape[-2], 8) * 8
    lane = _cdiv(shape[-1], 128) * 128
    return lead * sub * lane * itemsize


def _pick_block_b(B, L):
    """Batch tile: fill the MXU M-dim (conv3 sees bt*L/4 rows) under a VMEM row cap;
    keep the grid length >= 2 and even when cheap so v7x shards both TensorCores."""
    bt = max(1, min(_cdiv(2048, L), max(1, 4096 // L)))        # bt*L in [2048, 4096]
    bt = min(bt, B)
    nb = _cdiv(B, bt)
    if nb == 1 and B >= 2 and (B // 2) * L >= 1024:
        bt = _cdiv(B, 2)                                       # give the 2nd TC work
    elif nb > 1 and nb % 2 == 1:
        bt = _cdiv(B, nb + 1)                                  # even grid length
    return max(bt, 1)


def _vmem_limit_bytes(estimate):
    """Scoped-VMEM limit: generous but always within physical VMEM (v7x = 64 MiB/TC)."""
    try:
        cap = int(pltpu.get_tpu_info().vmem_capacity_bytes)
    except Exception:
        cap = 64 * 2 ** 20                                     # conservative (v7x) fallback
    hard = min(56 * 2 ** 20, (cap * 7) // 8)
    return int(min(hard, max(32 * 2 ** 20, estimate)))


# --------------------------------- wrapper ---------------------------------

def conv_forecaster_forward(x, params, out_size, block_b=None):
    """x: (B, L, c_in) channels-last (== PyTorch (batch, seq_len, features))."""
    B, L, c_in = x.shape
    assert L % 4 == 0, "two stride-2 maxpools require L % 4 == 0"
    assert out_size <= OUT_PAD

    bt = _pick_block_b(B, L) if block_b is None else max(1, min(int(block_b), B))
    nb = _cdiv(B, bt)
    b_pad = nb * bt
    if b_pad != B:                                             # pad batch, never shrink tile
        x = jnp.pad(x, ((0, b_pad - B), (0, 0), (0, 0)))

    # Hoisted AdaptiveAvgPool selector: 0/1 bf16 (bt, bt*L/4); 1/L4 applied in-kernel.
    l4 = L // 4
    pmat_np = (np.arange(bt * l4)[None, :] // l4) == np.arange(bt)[:, None]
    pmat = jnp.asarray(pmat_np.astype(np.float32), dtype=jnp.bfloat16)

    def const_spec(p):
        nd = p.ndim
        return pl.BlockSpec(p.shape, lambda i: (0,) * nd)      # VMEM-resident constants

    in_specs = [pl.BlockSpec((bt, L, c_in), lambda i: (i, 0, 0))]
    in_specs += [const_spec(p) for p in params]
    in_specs += [const_spec(pmat)]
    out_spec = pl.BlockSpec((1, bt, OUT_PAD), lambda i: (i, 0, 0))  # lane-dense output
    out_shape = jax.ShapeDtypeStruct((nb, bt, OUT_PAD), jnp.float32)

    # Tile-padded VMEM footprint: double-buffered inputs/output + activation slabs.
    n = bt * L
    bufs = 2 * (_padded_bytes((bt, L, c_in), 4)
                + sum(_padded_bytes(p.shape, p.dtype.itemsize) for p in params)
                + _padded_bytes(pmat.shape, 2)
                + _padded_bytes((1, bt, OUT_PAD), 4))
    act = (3 * _padded_bytes((n, c_in), 4)                     # x + 2 shifted taps (f32)
           + _padded_bytes((n, 64), 4) + _padded_bytes((n, 64), 2)
           + 4 * _padded_bytes((n // 2, 64), 2) + _padded_bytes((n // 2, 192), 2)
           + _padded_bytes((n // 2, 128), 4) + _padded_bytes((n // 2, 128), 2)
           + 4 * _padded_bytes((n // 4, 128), 2) + _padded_bytes((n // 4, 384), 2)
           + _padded_bytes((n // 4, 256), 4) + _padded_bytes((n // 4, 256), 2)
           + _padded_bytes((bt, 1024), 4))                     # head slack
    vmem_limit = _vmem_limit_bytes(int(1.5 * (bufs + act)))

    flops = 2 * b_pad * (L * (3 * c_in) * 64
                         + (L // 2) * 192 * 128
                         + (L // 4) * 384 * 256
                         + (L // 4) * 256
                         + 256 * 128 + 128 * 64 + 64 * OUT_PAD)
    param_bytes = sum(int(np.prod(p.shape)) * p.dtype.itemsize for p in params)
    bytes_accessed = int(b_pad * L * c_in * 4 + param_bytes + pmat.size * 2
                         + b_pad * OUT_PAD * 4)

    y = pl.pallas_call(
        forecaster_kernel,
        out_shape=out_shape,
        grid_spec=pltpu.PrefetchScalarGridSpec(
            num_scalar_prefetch=0,
            grid=(nb,),
            in_specs=in_specs,
            out_specs=out_spec),
        compiler_params=pltpu.CompilerParams(
            dimension_semantics=("parallel",),
            vmem_limit_bytes=vmem_limit),
        cost_estimate=pl.CostEstimate(flops=int(flops), transcendentals=0,
                                      bytes_accessed=bytes_accessed),
    )(x, *params, pmat)
    return y.reshape(b_pad, OUT_PAD)[:B, :out_size]


# ------------------------- deterministic parameters ------------------------

def make_params(key, c_in, out_size=1):
    keys = iter(jax.random.split(key, 32))

    def nrm(shape, scale=0.1):
        return scale * jax.random.normal(next(keys), shape, jnp.float32)

    def conv_bn(cin, cout, eps=1e-5):
        # PyTorch Conv1d weight (Cout, Cin, 3) + bias; BatchNorm1d folded (eval mode).
        w = nrm((cout, cin, 3))
        b = nrm((cout,))
        gamma = 1.0 + 0.1 * jax.random.normal(next(keys), (cout,), jnp.float32)
        beta = nrm((cout,))
        mean = nrm((cout,))
        var = jnp.abs(1.0 + 0.1 * jax.random.normal(next(keys), (cout,), jnp.float32))
        scale = gamma / jnp.sqrt(var + eps)
        # fold BN in f32, (Cout,Cin,3) -> (3,Cin,Cout): rows tap-major [x[l-1],x[l],x[l+1]]
        w_tio = (w * scale[:, None, None]).transpose(2, 1, 0).astype(jnp.float32)
        b_fold = ((b - mean) * scale + beta).reshape(1, cout).astype(jnp.float32)
        return w_tio, b_fold

    def linear(cin, cout, pad_to=None):
        w = nrm((cout, cin)).T                                 # (in, out)
        b = nrm((cout,)).reshape(1, cout)
        if pad_to is not None:
            w = jnp.pad(w, ((0, 0), (0, pad_to - cout)))
            b = jnp.pad(b, ((0, 0), (0, pad_to - cout)))
        return w.astype(jnp.bfloat16), b.astype(jnp.float32)

    w1, b1 = conv_bn(c_in, 64)                                 # layer-1 weights stay f32
    w2_tio, b2 = conv_bn(64, 128)
    w3_tio, b3 = conv_bn(128, 256)
    w2 = w2_tio.reshape(3 * 64, 128).astype(jnp.bfloat16)      # fused-K im2col weights
    w3 = w3_tio.reshape(3 * 128, 256).astype(jnp.bfloat16)
    fw1, fb1 = linear(256, 128)
    fw2, fb2 = linear(128, 64)
    fw3, fb3 = linear(64, out_size, pad_to=OUT_PAD)            # lane-dense head
    return (w1, b1, w2, b2, w3, b3, fw1, fb1, fw2, fb2, fw3, fb3)


# ------------------------------ JAX reference -------------------------------

def ref_forward(x_blc, params, out_size):
    """Plain-JAX reference mirroring the PyTorch module (eval mode, BN folded)."""
    w1, b1, w2, b2, w3, b3, fw1, fb1, fw2, fb2, fw3, fb3 = params
    x = jnp.transpose(x_blc, (0, 2, 1))                        # (B, C, L) like torch

    def conv_tio(h, w_tio, b):                                 # w_tio: (3, Cin, Cout)
        w_oik = jnp.transpose(w_tio.astype(jnp.float32), (2, 1, 0))   # (O, I, 3)
        y = jax.lax.conv_general_dilated(
            h, w_oik, window_strides=(1,), padding=((1, 1),),
            dimension_numbers=('NCH', 'OIH', 'NCH'))
        return y + b.reshape(1, -1, 1)

    def conv_fused(h, w_rows, b):                              # w_rows: (3*Cin, Cout)
        cin = h.shape[1]
        return conv_tio(h, w_rows.astype(jnp.float32).reshape(3, cin, -1), b)

    def maxpool(h):
        return jax.lax.reduce_window(h, -jnp.inf, jax.lax.max,
                                     (1, 1, 2), (1, 1, 2), 'VALID')

    h = jax.nn.relu(conv_tio(x, w1, b1)); h = maxpool(h)
    h = jax.nn.relu(conv_fused(h, w2, b2)); h = maxpool(h)
    h = jax.nn.relu(conv_fused(h, w3, b3))
    h = jnp.mean(h, axis=2)                                    # (B, 256)
    h = jax.nn.relu(h @ fw1.astype(jnp.float32) + fb1)
    h = jax.nn.relu(h @ fw2.astype(jnp.float32) + fb2)
    out = h @ fw3.astype(jnp.float32) + fb3
    return out[:, :out_size]


# ----------------------------------- main -----------------------------------

if __name__ == "__main__":
    B, L, C_IN, OUT = 4, 16, 4, 1                 # batch, seq_len, channels, output

    key = jax.random.PRNGKey(0)
    kx, kp = jax.random.split(key)
    x = jax.random.normal(kx, (B, L, C_IN), jnp.float32)   # (batch, seq_len, features)
    params = make_params(kp, C_IN, OUT)

    # grid=(2,), bt=2
    out = jax.block_until_ready(conv_forecaster_forward(x, params, OUT, block_b=2))
    ref = jax.block_until_ready(ref_forward(x, params, OUT))
    assert out.shape == (B, OUT), out.shape
    # bf16 MXU operands with f32 accumulation -> loosened tolerance vs f32 reference.
    np.testing.assert_allclose(np.asarray(out), np.asarray(ref), rtol=2e-2, atol=2e-2)

    # exercise the batch-padding path (B=3 padded to 4, one zero row dropped)
    x3 = x[:3]
    out3 = jax.block_until_ready(conv_forecaster_forward(x3, params, OUT, block_b=2))
    ref3 = jax.block_until_ready(ref_forward(x3, params, OUT))
    np.testing.assert_allclose(np.asarray(out3), np.asarray(ref3), rtol=2e-2, atol=2e-2)

    print("KERNEL_OK")
</pallas_src>

<mosaic_0001>
module attributes {stable_mosaic.version = 11 : i64} {
  func.func @forecaster_kernel(%arg0: i32, %arg1: memref<2x16x4xf32, #tpu.memory_space<vmem>>, %arg2: memref<3x4x64xf32, #tpu.memory_space<vmem>>, %arg3: memref<1x64xf32, #tpu.memory_space<vmem>>, %arg4: memref<192x128xbf16, #tpu.memory_space<vmem>>, %arg5: memref<1x128xf32, #tpu.memory_space<vmem>>, %arg6: memref<384x256xbf16, #tpu.memory_space<vmem>>, %arg7: memref<1x256xf32, #tpu.memory_space<vmem>>, %arg8: memref<256x128xbf16, #tpu.memory_space<vmem>>, %arg9: memref<1x128xf32, #tpu.memory_space<vmem>>, %arg10: memref<128x64xbf16, #tpu.memory_space<vmem>>, %arg11: memref<1x64xf32, #tpu.memory_space<vmem>>, %arg12: memref<64x128xbf16, #tpu.memory_space<vmem>>, %arg13: memref<1x128xf32, #tpu.memory_space<vmem>>, %arg14: memref<2x8xbf16, #tpu.memory_space<vmem>>, %arg15: memref<1x2x128xf32, #tpu.memory_space<vmem>>) attributes {dimension_semantics = [#tpu.dimension_semantics<parallel>], iteration_bounds = array<i64: 2>, scalar_prefetch = 0 : i64, scratch_operands = 0 : i64, tpu.core_type = #tpu.core_type<tc>, window_params = [{transform_indices = @transform_0, window_bounds = array<i64: 2, 16, 4>}, {pipeline_mode = #tpu.pipeline_mode<synchronous>, transform_indices = @transform_1, window_bounds = array<i64: 3, 4, 64>}, {pipeline_mode = #tpu.pipeline_mode<synchronous>, transform_indices = @transform_2, window_bounds = array<i64: 1, 64>}, {pipeline_mode = #tpu.pipeline_mode<synchronous>, transform_indices = @transform_3, window_bounds = array<i64: 192, 128>}, {pipeline_mode = #tpu.pipeline_mode<synchronous>, transform_indices = @transform_4, window_bounds = array<i64: 1, 128>}, {pipeline_mode = #tpu.pipeline_mode<synchronous>, transform_indices = @transform_5, window_bounds = array<i64: 384, 256>}, {pipeline_mode = #tpu.pipeline_mode<synchronous>, transform_indices = @transform_6, window_bounds = array<i64: 1, 256>}, {pipeline_mode = #tpu.pipeline_mode<synchronous>, transform_indices = @transform_7, window_bounds = array<i64: 256, 128>}, {pipeline_mode = #tpu.pipeline_mode<synchronous>, transform_indices = @transform_8, window_bounds = array<i64: 1, 128>}, {pipeline_mode = #tpu.pipeline_mode<synchronous>, transform_indices = @transform_9, window_bounds = array<i64: 128, 64>}, {pipeline_mode = #tpu.pipeline_mode<synchronous>, transform_indices = @transform_10, window_bounds = array<i64: 1, 64>}, {pipeline_mode = #tpu.pipeline_mode<synchronous>, transform_indices = @transform_11, window_bounds = array<i64: 64, 128>}, {pipeline_mode = #tpu.pipeline_mode<synchronous>, transform_indices = @transform_12, window_bounds = array<i64: 1, 128>}, {pipeline_mode = #tpu.pipeline_mode<synchronous>, transform_indices = @transform_13, window_bounds = array<i64: 2, 8>}, {transform_indices = @transform_14, window_bounds = array<i64: 1, 2, 128>}]} {
    %c0 = arith.constant 0 : index
    %c0_0 = arith.constant 0 : index
    %c0_1 = arith.constant 0 : index
    %0 = vector.load %arg1[%c0, %c0_0, %c0_1] : memref<2x16x4xf32, #tpu.memory_space<vmem>>, vector<2x16x4xf32>
    %1 = vector.shape_cast %0 : vector<2x16x4xf32> to vector<32x4xf32>
    %cst = arith.constant 0.000000e+00 : f32
    %2 = vector.broadcast %cst : f32 to vector<1x4xf32>
    %3 = vector.extract_strided_slice %1 {offsets = [0, 0], sizes = [31, 4], strides = [1, 1]} : vector<32x4xf32> to vector<31x4xf32>
    %4 = tpu.concatenate %2, %3 in 0 : vector<1x4xf32>, vector<31x4xf32> -> vector<32x4xf32>
    %5 = vector.extract_strided_slice %1 {offsets = [1, 0], sizes = [31, 4], strides = [1, 1]} : vector<32x4xf32> to vector<31x4xf32>
    %6 = tpu.concatenate %5, %2 in 0 : vector<31x4xf32>, vector<1x4xf32> -> vector<32x4xf32>
    %7 = tpu.iota {dimensions = array<i32: 0>} : vector<32x1xi32>
    %c16_i32 = arith.constant 16 : i32
    %c0_i32 = arith.constant 0 : i32
    %8 = arith.cmpi eq, %c16_i32, %c0_i32 : i32
    %c1_i32 = arith.constant 1 : i32
    %9 = arith.select %8, %c1_i32, %c16_i32 : i32
    %10 = vector.broadcast %9 : i32 to vector<32x1xi32>
    %11 = arith.remsi %7, %10 : vector<32x1xi32>
    %c0_i32_2 = arith.constant 0 : i32
    %12 = vector.broadcast %c0_i32_2 : i32 to vector<32x1xi32>
    %13 = arith.cmpi ne, %11, %12 : vector<32x1xi32>
    %c0_i32_3 = arith.constant 0 : i32
    %14 = vector.broadcast %c0_i32_3 : i32 to vector<32x1xi32>
    %15 = arith.cmpi slt, %11, %14 : vector<32x1xi32>
    %c0_i32_4 = arith.constant 0 : i32
    %16 = arith.cmpi slt, %9, %c0_i32_4 : i32
    %17 = vector.broadcast %16 : i1 to vector<32x1xi1>
    %18 = vector.broadcast %17 : vector<32x1xi1> to vector<32x1xi1>
    %19 = arith.xori %15, %18 : vector<32x1xi1>
    %20 = arith.andi %19, %13 : vector<32x1xi1>
    %21 = vector.broadcast %9 : i32 to vector<32x1xi32>
    %22 = arith.addi %11, %21 : vector<32x1xi32>
    %23 = arith.select %20, %22, %11 : vector<32x1xi1>, vector<32x1xi32>
    %c0_i32_5 = arith.constant 0 : i32
    %24 = vector.broadcast %c0_i32_5 : i32 to vector<32x1xi32>
    %25 = arith.cmpi sgt, %23, %24 : vector<32x1xi32>
    %cst_6 = arith.constant 0.000000e+00 : f32
    %26 = vector.shape_cast %25 : vector<32x1xi1> to vector<32x1xi1>
    %27 = vector.broadcast %26 : vector<32x1xi1> to vector<32x4xi1>
    %28 = vector.broadcast %cst_6 : f32 to vector<32x4xf32>
    %29 = arith.select %27, %4, %28 : vector<32x4xi1>, vector<32x4xf32>
    %c15_i32 = arith.constant 15 : i32
    %30 = vector.broadcast %c15_i32 : i32 to vector<32x1xi32>
    %31 = arith.cmpi slt, %23, %30 : vector<32x1xi32>
    %cst_7 = arith.constant 0.000000e+00 : f32
    %32 = vector.shape_cast %31 : vector<32x1xi1> to vector<32x1xi1>
    %33 = vector.broadcast %32 : vector<32x1xi1> to vector<32x4xi1>
    %34 = vector.broadcast %cst_7 : f32 to vector<32x4xf32>
    %35 = arith.select %33, %6, %34 : vector<32x4xi1>, vector<32x4xf32>
    %c0_8 = arith.constant 0 : index
    %c0_9 = arith.constant 0 : index
    %c0_10 = arith.constant 0 : index
    %36 = vector.load %arg2[%c0_8, %c0_9, %c0_10] : memref<3x4x64xf32, #tpu.memory_space<vmem>>, vector<1x4x64xf32>
    %37 = vector.shape_cast %36 : vector<1x4x64xf32> to vector<4x64xf32>
    %cst_11 = arith.constant dense<0.000000e+00> : vector<32x64xf32>
    %38 = tpu.matmul %29, %37, %cst_11 {dimension_numbers = #tpu.dot_dimension_numbers<[1], [0], [0], [1], [0, 0, 1, 1], [], []>} : vector<32x4xf32>, vector<4x64xf32>, vector<32x64xf32> -> vector<32x64xf32>
    %c1 = arith.constant 1 : index
    %c0_12 = arith.constant 0 : index
    %c0_13 = arith.constant 0 : index
    %39 = vector.load %arg2[%c1, %c0_12, %c0_13] : memref<3x4x64xf32, #tpu.memory_space<vmem>>, vector<1x4x64xf32>
    %40 = vector.shape_cast %39 : vector<1x4x64xf32> to vector<4x64xf32>
    %cst_14 = arith.constant dense<0.000000e+00> : vector<32x64xf32>
    %41 = tpu.matmul %1, %40, %cst_14 {dimension_numbers = #tpu.dot_dimension_numbers<[1], [0], [0], [1], [0, 0, 1, 1], [], []>} : vector<32x4xf32>, vector<4x64xf32>, vector<32x64xf32> -> vector<32x64xf32>
    %42 = arith.addf %38, %41 : vector<32x64xf32>
    %c2 = arith.constant 2 : index
    %c0_15 = arith.constant 0 : index
    %c0_16 = arith.constant 0 : index
    %43 = vector.load %arg2[%c2, %c0_15, %c0_16] : memref<3x4x64xf32, #tpu.memory_space<vmem>>, vector<1x4x64xf32>
    %44 = vector.shape_cast %43 : vector<1x4x64xf32> to vector<4x64xf32>
    %cst_17 = arith.constant dense<0.000000e+00> : vector<32x64xf32>
    %45 = tpu.matmul %35, %44, %cst_17 {dimension_numbers = #tpu.dot_dimension_numbers<[1], [0], [0], [1], [0, 0, 1, 1], [], []>} : vector<32x4xf32>, vector<4x64xf32>, vector<32x64xf32> -> vector<32x64xf32>
    %46 = arith.addf %42, %45 : vector<32x64xf32>
    %c0_18 = arith.constant 0 : index
    %c0_19 = arith.constant 0 : index
    %47 = vector.load %arg3[%c0_18, %c0_19] : memref<1x64xf32, #tpu.memory_space<vmem>>, vector<1x64xf32>
    %48 = vector.broadcast %47 : vector<1x64xf32> to vector<32x64xf32>
    %49 = arith.addf %46, %48 : vector<32x64xf32>
    %cst_20 = arith.constant 0.000000e+00 : f32
    %50 = vector.broadcast %cst_20 : f32 to vector<32x64xf32>
    %51 = arith.maximumf %49, %50 : vector<32x64xf32>
    %52 = arith.truncf %51 : vector<32x64xf32> to vector<32x64xbf16>
    %53 = vector.shape_cast %52 : vector<32x64xbf16> to vector<16x2x64xbf16>
    %cst_21 = arith.constant dense<0xFF80> : vector<16x64xbf16>
    %54 = vector.multi_reduction <maximumf>, %53, %cst_21 [1] : vector<16x2x64xbf16> to vector<16x64xbf16>
    %c0_22 = arith.constant 0 : index
    %c0_23 = arith.constant 0 : index
    %55 = vector.load %arg4[%c0_22, %c0_23] : memref<192x128xbf16, #tpu.memory_space<vmem>>, vector<192x128xbf16>
    %c0_24 = arith.constant 0 : index
    %c0_25 = arith.constant 0 : index
    %56 = vector.load %arg5[%c0_24, %c0_25] : memref<1x128xf32, #tpu.memory_space<vmem>>, vector<1x128xf32>
    %cst_26 = arith.constant 0.000000e+00 : bf16
    %57 = vector.broadcast %cst_26 : bf16 to vector<1x64xbf16>
    %58 = vector.extract_strided_slice %54 {offsets = [0, 0], sizes = [15, 64], strides = [1, 1]} : vector<16x64xbf16> to vector<15x64xbf16>
    %59 = tpu.concatenate %57, %58 in 0 : vector<1x64xbf16>, vector<15x64xbf16> -> vector<16x64xbf16>
    %60 = vector.extract_strided_slice %54 {offsets = [1, 0], sizes = [15, 64], strides = [1, 1]} : vector<16x64xbf16> to vector<15x64xbf16>
    %61 = tpu.concatenate %60, %57 in 0 : vector<15x64xbf16>, vector<1x64xbf16> -> vector<16x64xbf16>
    %62 = tpu.iota {dimensions = array<i32: 0>} : vector<16x1xi32>
    %c8_i32 = arith.constant 8 : i32
    %c0_i32_27 = arith.constant 0 : i32
    %63 = arith.cmpi eq, %c8_i32, %c0_i32_27 : i32
    %c1_i32_28 = arith.constant 1 : i32
    %64 = arith.select %63, %c1_i32_28, %c8_i32 : i32
    %65 = vector.broadcast %64 : i32 to vector<16x1xi32>
    %66 = arith.remsi %62, %65 : vector<16x1xi32>
    %c0_i32_29 = arith.constant 0 : i32
    %67 = vector.broadcast %c0_i32_29 : i32 to vector<16x1xi32>
    %68 = arith.cmpi ne, %66, %67 : vector<16x1xi32>
    %c0_i32_30 = arith.constant 0 : i32
    %69 = vector.broadcast %c0_i32_30 : i32 to vector<16x1xi32>
    %70 = arith.cmpi slt, %66, %69 : vector<16x1xi32>
    %c0_i32_31 = arith.constant 0 : i32
    %71 = arith.cmpi slt, %64, %c0_i32_31 : i32
    %72 = vector.broadcast %71 : i1 to vector<16x1xi1>
    %73 = vector.broadcast %72 : vector<16x1xi1> to vector<16x1xi1>
    %74 = arith.xori %70, %73 : vector<16x1xi1>
    %75 = arith.andi %74, %68 : vector<16x1xi1>
    %76 = vector.broadcast %64 : i32 to vector<16x1xi32>
    %77 = arith.addi %66, %76 : vector<16x1xi32>
    %78 = arith.select %75, %77, %66 : vector<16x1xi1>, vector<16x1xi32>
    %c0_i32_32 = arith.constant 0 : i32
    %79 = vector.broadcast %c0_i32_32 : i32 to vector<16x1xi32>
    %80 = arith.cmpi sgt, %78, %79 : vector<16x1xi32>
    %cst_33 = arith.constant 0.000000e+00 : f32
    %81 = arith.truncf %cst_33 : f32 to bf16
    %82 = vector.shape_cast %80 : vector<16x1xi1> to vector<16x1xi1>
    %83 = vector.broadcast %82 : vector<16x1xi1> to vector<16x64xi1>
    %84 = vector.broadcast %81 : bf16 to vector<16x64xbf16>
    %85 = arith.select %83, %59, %84 : vector<16x64xi1>, vector<16x64xbf16>
    %c7_i32 = arith.constant 7 : i32
    %86 = vector.broadcast %c7_i32 : i32 to vector<16x1xi32>
    %87 = arith.cmpi slt, %78, %86 : vector<16x1xi32>
    %cst_34 = arith.constant 0.000000e+00 : f32
    %88 = arith.truncf %cst_34 : f32 to bf16
    %89 = vector.shape_cast %87 : vector<16x1xi1> to vector<16x1xi1>
    %90 = vector.broadcast %89 : vector<16x1xi1> to vector<16x64xi1>
    %91 = vector.broadcast %88 : bf16 to vector<16x64xbf16>
    %92 = arith.select %90, %61, %91 : vector<16x64xi1>, vector<16x64xbf16>
    %93 = tpu.concatenate %85, %54, %92 in 1 : vector<16x64xbf16>, vector<16x64xbf16>, vector<16x64xbf16> -> vector<16x192xbf16>
    %cst_35 = arith.constant dense<0.000000e+00> : vector<16x128xf32>
    %94 = tpu.matmul %93, %55, %cst_35 {dimension_numbers = #tpu.dot_dimension_numbers<[1], [0], [0], [1], [0, 0, 1, 1], [], []>} : vector<16x192xbf16>, vector<192x128xbf16>, vector<16x128xf32> -> vector<16x128xf32>
    %95 = vector.broadcast %56 : vector<1x128xf32> to vector<16x128xf32>
    %96 = arith.addf %94, %95 : vector<16x128xf32>
    %cst_36 = arith.constant 0.000000e+00 : f32
    %97 = vector.broadcast %cst_36 : f32 to vector<16x128xf32>
    %98 = arith.maximumf %96, %97 : vector<16x128xf32>
    %99 = arith.truncf %98 : vector<16x128xf32> to vector<16x128xbf16>
    %100 = vector.shape_cast %99 : vector<16x128xbf16> to vector<8x2x128xbf16>
    %cst_37 = arith.constant dense<0xFF80> : vector<8x128xbf16>
    %101 = vector.multi_reduction <maximumf>, %100, %cst_37 [1] : vector<8x2x128xbf16> to vector<8x128xbf16>
    %c0_38 = arith.constant 0 : index
    %c0_39 = arith.constant 0 : index
    %102 = vector.load %arg6[%c0_38, %c0_39] : memref<384x256xbf16, #tpu.memory_space<vmem>>, vector<384x256xbf16>
    %c0_40 = arith.constant 0 : index
    %c0_41 = arith.constant 0 : index
    %103 = vector.load %arg7[%c0_40, %c0_41] : memref<1x256xf32, #tpu.memory_space<vmem>>, vector<1x256xf32>
    %cst_42 = arith.constant 0.000000e+00 : bf16
    %104 = vector.broadcast %cst_42 : bf16 to vector<1x128xbf16>
    %105 = vector.extract_strided_slice %101 {offsets = [0, 0], sizes = [7, 128], strides = [1, 1]} : vector<8x128xbf16> to vector<7x128xbf16>
    %106 = tpu.concatenate %104, %105 in 0 : vector<1x128xbf16>, vector<7x128xbf16> -> vector<8x128xbf16>
    %107 = vector.extract_strided_slice %101 {offsets = [1, 0], sizes = [7, 128], strides = [1, 1]} : vector<8x128xbf16> to vector<7x128xbf16>
    %108 = tpu.concatenate %107, %104 in 0 : vector<7x128xbf16>, vector<1x128xbf16> -> vector<8x128xbf16>
    %109 = tpu.iota {dimensions = array<i32: 0>} : vector<8x1xi32>
    %c4_i32 = arith.constant 4 : i32
    %c0_i32_43 = arith.constant 0 : i32
    %110 = arith.cmpi eq, %c4_i32, %c0_i32_43 : i32
    %c1_i32_44 = arith.constant 1 : i32
    %111 = arith.select %110, %c1_i32_44, %c4_i32 : i32
    %112 = vector.broadcast %111 : i32 to vector<8x1xi32>
    %113 = arith.remsi %109, %112 : vector<8x1xi32>
    %c0_i32_45 = arith.constant 0 : i32
    %114 = vector.broadcast %c0_i32_45 : i32 to vector<8x1xi32>
    %115 = arith.cmpi ne, %113, %114 : vector<8x1xi32>
    %c0_i32_46 = arith.constant 0 : i32
    %116 = vector.broadcast %c0_i32_46 : i32 to vector<8x1xi32>
    %117 = arith.cmpi slt, %113, %116 : vector<8x1xi32>
    %c0_i32_47 = arith.constant 0 : i32
    %118 = arith.cmpi slt, %111, %c0_i32_47 : i32
    %119 = vector.broadcast %118 : i1 to vector<8x1xi1>
    %120 = vector.broadcast %119 : vector<8x1xi1> to vector<8x1xi1>
    %121 = arith.xori %117, %120 : vector<8x1xi1>
    %122 = arith.andi %121, %115 : vector<8x1xi1>
    %123 = vector.broadcast %111 : i32 to vector<8x1xi32>
    %124 = arith.addi %113, %123 : vector<8x1xi32>
    %125 = arith.select %122, %124, %113 : vector<8x1xi1>, vector<8x1xi32>
    %c0_i32_48 = arith.constant 0 : i32
    %126 = vector.broadcast %c0_i32_48 : i32 to vector<8x1xi32>
    %127 = arith.cmpi sgt, %125, %126 : vector<8x1xi32>
    %cst_49 = arith.constant 0.000000e+00 : f32
    %128 = arith.truncf %cst_49 : f32 to bf16
    %129 = vector.shape_cast %127 : vector<8x1xi1> to vector<8x1xi1>
    %130 = vector.broadcast %129 : vector<8x1xi1> to vector<8x128xi1>
    %131 = vector.broadcast %128 : bf16 to vector<8x128xbf16>
    %132 = arith.select %130, %106, %131 : vector<8x128xi1>, vector<8x128xbf16>
    %c3_i32 = arith.constant 3 : i32
    %133 = vector.broadcast %c3_i32 : i32 to vector<8x1xi32>
    %134 = arith.cmpi slt, %125, %133 : vector<8x1xi32>
    %cst_50 = arith.constant 0.000000e+00 : f32
    %135 = arith.truncf %cst_50 : f32 to bf16
    %136 = vector.shape_cast %134 : vector<8x1xi1> to vector<8x1xi1>
    %137 = vector.broadcast %136 : vector<8x1xi1> to vector<8x128xi1>
    %138 = vector.broadcast %135 : bf16 to vector<8x128xbf16>
    %139 = arith.select %137, %108, %138 : vector<8x128xi1>, vector<8x128xbf16>
    %140 = tpu.concatenate %132, %101, %139 in 1 : vector<8x128xbf16>, vector<8x128xbf16>, vector<8x128xbf16> -> vector<8x384xbf16>
    %cst_51 = arith.constant dense<0.000000e+00> : vector<8x256xf32>
    %141 = tpu.matmul %140, %102, %cst_51 {dimension_numbers = #tpu.dot_dimension_numbers<[1], [0], [0], [1], [0, 0, 1, 1], [], []>} : vector<8x384xbf16>, vector<384x256xbf16>, vector<8x256xf32> -> vector<8x256xf32>
    %142 = vector.broadcast %103 : vector<1x256xf32> to vector<8x256xf32>
    %143 = arith.addf %141, %142 : vector<8x256xf32>
    %cst_52 = arith.constant 0.000000e+00 : f32
    %144 = vector.broadcast %cst_52 : f32 to vector<8x256xf32>
    %145 = arith.maximumf %143, %144 : vector<8x256xf32>
    %146 = arith.truncf %145 : vector<8x256xf32> to vector<8x256xbf16>
    %c0_53 = arith.constant 0 : index
    %c0_54 = arith.constant 0 : index
    %147 = vector.load %arg14[%c0_53, %c0_54] : memref<2x8xbf16, #tpu.memory_space<vmem>>, vector<2x8xbf16>
    %cst_55 = arith.constant dense<0.000000e+00> : vector<2x256xf32>
    %148 = tpu.matmul %147, %146, %cst_55 {dimension_numbers = #tpu.dot_dimension_numbers<[1], [0], [0], [1], [0, 0, 1, 1], [], []>} : vector<2x8xbf16>, vector<8x256xbf16>, vector<2x256xf32> -> vector<2x256xf32>
    %cst_56 = arith.constant 2.500000e-01 : f32
    %149 = vector.broadcast %cst_56 : f32 to vector<2x256xf32>
    %150 = arith.mulf %148, %149 : vector<2x256xf32>
    %151 = arith.truncf %150 : vector<2x256xf32> to vector<2x256xbf16>
    %c0_57 = arith.constant 0 : index
    %c0_58 = arith.constant 0 : index
    %152 = vector.load %arg8[%c0_57, %c0_58] : memref<256x128xbf16, #tpu.memory_space<vmem>>, vector<256x128xbf16>
    %cst_59 = arith.constant dense<0.000000e+00> : vector<2x128xf32>
    %153 = tpu.matmul %151, %152, %cst_59 {dimension_numbers = #tpu.dot_dimension_numbers<[1], [0], [0], [1], [0, 0, 1, 1], [], []>} : vector<2x256xbf16>, vector<256x128xbf16>, vector<2x128xf32> -> vector<2x128xf32>
    %c0_60 = arith.constant 0 : index
    %c0_61 = arith.constant 0 : index
    %154 = vector.load %arg9[%c0_60, %c0_61] : memref<1x128xf32, #tpu.memory_space<vmem>>, vector<1x128xf32>
    %155 = vector.broadcast %154 : vector<1x128xf32> to vector<2x128xf32>
    %156 = arith.addf %153, %155 : vector<2x128xf32>
    %cst_62 = arith.constant 0.000000e+00 : f32
    %157 = vector.broadcast %cst_62 : f32 to vector<2x128xf32>
    %158 = arith.maximumf %156, %157 : vector<2x128xf32>
    %159 = arith.truncf %158 : vector<2x128xf32> to vector<2x128xbf16>
    %c0_63 = arith.constant 0 : index
    %c0_64 = arith.constant 0 : index
    %160 = vector.load %arg10[%c0_63, %c0_64] : memref<128x64xbf16, #tpu.memory_space<vmem>>, vector<128x64xbf16>
    %cst_65 = arith.constant dense<0.000000e+00> : vector<2x64xf32>
    %161 = tpu.matmul %159, %160, %cst_65 {dimension_numbers = #tpu.dot_dimension_numbers<[1], [0], [0], [1], [0, 0, 1, 1], [], []>} : vector<2x128xbf16>, vector<128x64xbf16>, vector<2x64xf32> -> vector<2x64xf32>
    %c0_66 = arith.constant 0 : index
    %c0_67 = arith.constant 0 : index
    %162 = vector.load %arg11[%c0_66, %c0_67] : memref<1x64xf32, #tpu.memory_space<vmem>>, vector<1x64xf32>
    %163 = vector.broadcast %162 : vector<1x64xf32> to vector<2x64xf32>
    %164 = arith.addf %161, %163 : vector<2x64xf32>
    %cst_68 = arith.constant 0.000000e+00 : f32
    %165 = vector.broadcast %cst_68 : f32 to vector<2x64xf32>
    %166 = arith.maximumf %164, %165 : vector<2x64xf32>
    %167 = arith.truncf %166 : vector<2x64xf32> to vector<2x64xbf16>
    %c0_69 = arith.constant 0 : index
    %c0_70 = arith.constant 0 : index
    %168 = vector.load %arg12[%c0_69, %c0_70] : memref<64x128xbf16, #tpu.memory_space<vmem>>, vector<64x128xbf16>
    %cst_71 = arith.constant dense<0.000000e+00> : vector<2x128xf32>
    %169 = tpu.matmul %167, %168, %cst_71 {dimension_numbers = #tpu.dot_dimension_numbers<[1], [0], [0], [1], [0, 0, 1, 1], [], []>} : vector<2x64xbf16>, vector<64x128xbf16>, vector<2x128xf32> -> vector<2x128xf32>
    %c0_72 = arith.constant 0 : index
    %c0_73 = arith.constant 0 : index
    %170 = vector.load %arg13[%c0_72, %c0_73] : memref<1x128xf32, #tpu.memory_space<vmem>>, vector<1x128xf32>
    %171 = vector.broadcast %170 : vector<1x128xf32> to vector<2x128xf32>
    %172 = arith.addf %169, %171 : vector<2x128xf32>
    %c0_74 = arith.constant 0 : index
    %c0_75 = arith.constant 0 : index
    %c0_76 = arith.constant 0 : index
    %173 = vector.load %arg15[%c0_74, %c0_75, %c0_76] : memref<1x2x128xf32, #tpu.memory_space<vmem>>, vector<1x2x128xf32>
    %174 = vector.shape_cast %173 : vector<1x2x128xf32> to vector<2x128xf32>
    %175 = vector.shape_cast %172 : vector<2x128xf32> to vector<1x2x128xf32>
    tpu.vector_store %arg15[%c0_74, %c0_75, %c0_76], %175 {strides = array<i32>} : memref<1x2x128xf32, #tpu.memory_space<vmem>>, vector<1x2x128xf32>,
    return
  }
  func.func @transform_0(%arg0: i32) -> (i32, i32, i32) {
    %c0_i32 = arith.constant 0 : i32
    %c0_i32_0 = arith.constant 0 : i32
    %c0_i32_1 = arith.constant 0 : i32
    return %arg0, %c0_i32, %c0_i32_0 : i32, i32, i32
  }
  func.func @transform_1(%arg0: i32) -> (i32, i32, i32) {
    %c0_i32 = arith.constant 0 : i32
    %c0_i32_0 = arith.constant 0 : i32
    %c0_i32_1 = arith.constant 0 : i32
    %c0_i32_2 = arith.constant 0 : i32
    return %c0_i32, %c0_i32_0, %c0_i32_1 : i32, i32, i32
  }
  func.func @transform_2(%arg0: i32) -> (i32, i32) {
    %c0_i32 = arith.constant 0 : i32
    %c0_i32_0 = arith.constant 0 : i32
    %c0_i32_1 = arith.constant 0 : i32
    return %c0_i32, %c0_i32_0 : i32, i32
  }
  func.func @transform_3(%arg0: i32) -> (i32, i32) {
    %c0_i32 = arith.constant 0 : i32
    %c0_i32_0 = arith.constant 0 : i32
    %c0_i32_1 = arith.constant 0 : i32
    return %c0_i32, %c0_i32_0 : i32, i32
  }
  func.func @transform_4(%arg0: i32) -> (i32, i32) {
    %c0_i32 = arith.constant 0 : i32
    %c0_i32_0 = arith.constant 0 : i32
    %c0_i32_1 = arith.constant 0 : i32
    return %c0_i32, %c0_i32_0 : i32, i32
  }
  func.func @transform_5(%arg0: i32) -> (i32, i32) {
    %c0_i32 = arith.constant 0 : i32
    %c0_i32_0 = arith.constant 0 : i32
    %c0_i32_1 = arith.constant 0 : i32
    return %c0_i32, %c0_i32_0 : i32, i32
  }
  func.func @transform_6(%arg0: i32) -> (i32, i32) {
    %c0_i32 = arith.constant 0 : i32
    %c0_i32_0 = arith.constant 0 : i32
    %c0_i32_1 = arith.constant 0 : i32
    return %c0_i32, %c0_i32_0 : i32, i32
  }
  func.func @transform_7(%arg0: i32) -> (i32, i32) {
    %c0_i32 = arith.constant 0 : i32
    %c0_i32_0 = arith.constant 0 : i32
    %c0_i32_1 = arith.constant 0 : i32
    return %c0_i32, %c0_i32_0 : i32, i32
  }
  func.func @transform_8(%arg0: i32) -> (i32, i32) {
    %c0_i32 = arith.constant 0 : i32
    %c0_i32_0 = arith.constant 0 : i32
    %c0_i32_1 = arith.constant 0 : i32
    return %c0_i32, %c0_i32_0 : i32, i32
  }
  func.func @transform_9(%arg0: i32) -> (i32, i32) {
    %c0_i32 = arith.constant 0 : i32
    %c0_i32_0 = arith.constant 0 : i32
    %c0_i32_1 = arith.constant 0 : i32
    return %c0_i32, %c0_i32_0 : i32, i32
  }
  func.func @transform_10(%arg0: i32) -> (i32, i32) {
    %c0_i32 = arith.constant 0 : i32
    %c0_i32_0 = arith.constant 0 : i32
    %c0_i32_1 = arith.constant 0 : i32
    return %c0_i32, %c0_i32_0 : i32, i32
  }
  func.func @transform_11(%arg0: i32) -> (i32, i32) {
    %c0_i32 = arith.constant 0 : i32
    %c0_i32_0 = arith.constant 0 : i32
    %c0_i32_1 = arith.constant 0 : i32
    return %c0_i32, %c0_i32_0 : i32, i32
  }
  func.func @transform_12(%arg0: i32) -> (i32, i32) {
    %c0_i32 = arith.constant 0 : i32
    %c0_i32_0 = arith.constant 0 : i32
    %c0_i32_1 = arith.constant 0 : i32
    return %c0_i32, %c0_i32_0 : i32, i32
  }
  func.func @transform_13(%arg0: i32) -> (i32, i32) {
    %c0_i32 = arith.constant 0 : i32
    %c0_i32_0 = arith.constant 0 : i32
    %c0_i32_1 = arith.constant 0 : i32
    return %c0_i32, %c0_i32_0 : i32, i32
  }
  func.func @transform_14(%arg0: i32) -> (i32, i32, i32) {
    %c0_i32 = arith.constant 0 : i32
    %c0_i32_0 = arith.constant 0 : i32
    %c0_i32_1 = arith.constant 0 : i32
    return %arg0, %c0_i32, %c0_i32_0 : i32, i32, i32
  }
}

</mosaic_0001>

<llo_original>
// kernel: tpu_custom_call.1
$region0: #{tpu_custom_call.1}
  #allocation0 [shape = 'u32[]', space=smem, size = 0x4, offset = 0x4, fixed_abs, tag = 'smem constant byte address 0x4 - core index']
  #allocation1 [shape = 'u32[144,128]{1,0:T(1,128)}', space=vmem, size = 0x12000, scoped, tag = 'internal scratch']
  %s0 = inlined_call_operand.vmem [shape: f32[4,16,4], index: 0, kind: input, shape index: {}]
  %s1 = inlined_call_operand.vmem [shape: f32[3,4,64], index: 1, kind: input, shape index: {}]
  %s2 = inlined_call_operand.hbm [shape: f32[1,64], index: 2, kind: input, shape index: {}]
  %s3 = inlined_call_operand.hbm [shape: bf16[192,128], index: 3, kind: input, shape index: {}]
  %s4 = inlined_call_operand.hbm [shape: f32[1,128], index: 4, kind: input, shape index: {}]
  %s5 = inlined_call_operand.hbm [shape: bf16[384,256], index: 5, kind: input, shape index: {}]
  %s6 = inlined_call_operand.vmem [shape: f32[1,256], index: 6, kind: input, shape index: {}]
  %s7 = inlined_call_operand.vmem [shape: bf16[256,128], index: 7, kind: input, shape index: {}]
  %s8 = inlined_call_operand.hbm [shape: f32[1,128], index: 8, kind: input, shape index: {}]
  %s9 = inlined_call_operand.vmem [shape: bf16[128,64], index: 9, kind: input, shape index: {}]
  %s10 = inlined_call_operand.vmem [shape: f32[1,64], index: 10, kind: input, shape index: {}]
  %s11 = inlined_call_operand.vmem [shape: bf16[64,128], index: 11, kind: input, shape index: {}]
  %s12 = inlined_call_operand.vmem [shape: f32[1,128], index: 12, kind: input, shape index: {}]
  %s13 = inlined_call_operand.vmem [shape: bf16[2,8], index: 13, kind: input, shape index: {}]
  %s14 = inlined_call_operand.hbm [shape: f32[2,2,128], index: 14, kind: output, shape index: {}]
  %s15 = sld [smem:[#allocation0]]
  $region109: #{tpu_custom_call.1} parent=0
    _
  %s17 = ssub.s32 1, %s15
  %s18 = scalar_select 0, %s17, %s15
  $region1: #{tpu_custom_call.1} parent=0
    #allocation2 [shape = 'u8[512]{0}', space=vmem, size = 0x400, scoped, tag = 'input window, operand 2, single buffered']
    #allocation3 [shape = 's32[2]{0}', space=sflag, size = 0x8, scoped, tag = 'scoped memory for tpu_custom_call.1']
    #allocation4 [shape = 's32[2]{0}', space=sflag, size = 0x8, scoped, tag = 'scoped memory for tpu_custom_call.1']
    #allocation5 [shape = 'u8[49152]{0}', space=vmem, size = 0xc000, scoped, tag = 'input window, operand 3, single buffered']
    #allocation6 [shape = 's32[1]{0}', space=sflag, size = 0x4, scoped, tag = 'scoped memory for tpu_custom_call.1']
    #allocation7 [shape = 'u8[512]{0}', space=vmem, size = 0x400, scoped, tag = 'input window, operand 4, single buffered']
    #allocation8 [shape = 'u8[196608]{0}', space=vmem, size = 0x30000, scoped, tag = 'input window, operand 5, single buffered']
    #allocation9 [shape = 's32[1]{0}', space=sflag, size = 0x4, scoped, tag = 'scoped memory for tpu_custom_call.1']
    #allocation10 [shape = 'u8[512]{0}', space=vmem, size = 0x400, scoped, tag = 'input window, operand 8, single buffered']
    #allocation11 [shape = 'u8[2048]{0}', space=vmem, size = 0x800, scoped, tag = 'output window, operand 0']
    %19 = vsyncpa [#allocation3], 0
    %20 = vsyncpa [#allocation6], 0
    %21 = vsyncpa [#allocation9], 0
    %22 = vsyncpa [#allocation4], 0
    %s23 = scalar_lea.sflag [#allocation4], 1
    %24 = vsyncpa %s23, 0
    loop: start=0, step=1, limit=4
    $region2: #{tpu_custom_call.1} parent=1 // loop_pre_header
      _
    $region3: #{tpu_custom_call.1} parent=1 // loop_header
      %s26 = sphi 0, %s30
      %p27 = scmp.ge.s32.totalorder %s26, 4
      %s36 = sphi 0, %s38
      %s39 = sphi 0, %s36
      %s40 = sphi 0, %s39
      %s56 = sphi 0, %s40
      %s60 = sphi 0, %s60
      %s62 = sphi 0, %s60
      %s63 = sphi 0, %s62
      %s77 = sphi 0, %s63
      %s81 = sphi 0, %s81
      %s83 = sphi 0, %s81
      %s84 = sphi 0, %s83
      %s98 = sphi 0, %s84
      %s102 = sphi 0, %s102
      %s104 = sphi 0, %s102
      %s105 = sphi 0, %s104
      %s119 = sphi 0, %s105
      %s123 = sphi 0, %s123
      %s125 = sphi 0, %s123
      %s126 = sphi 0, %s125
      %s140 = sphi 0, %s126
      %s144 = sphi 0, %s144
      %s146 = sphi 0, %s144
      %s147 = sphi 0, %s146
      %s161 = sphi 0, %s147
      %s165 = sphi 0, %s165
      %s167 = sphi 0, %s165
      %s168 = sphi 0, %s167
      %s182 = sphi 0, %s168
      %s186 = sphi 0, %s186
      %s188 = sphi 0, %s186
      %s189 = sphi 0, %s188
      %s203 = sphi 0, %s189
      %s207 = sphi 0, %s207
      %s209 = sphi 0, %s207
      %s210 = sphi 0, %s209
      %s224 = sphi 0, %s210
      %s228 = sphi 0, %s228
      %s230 = sphi 0, %s228
      %s231 = sphi 0, %s230
      %s245 = sphi 0, %s231
      %s249 = sphi 0, %s249
      %s251 = sphi 0, %s249
      %s252 = sphi 0, %s251
      %s266 = sphi 0, %s252
      %s270 = sphi 0, %s270
      %s272 = sphi 0, %s270
      %s273 = sphi 0, %s272
      %s287 = sphi 0, %s273
      %s291 = sphi 0, %s291
      %s293 = sphi 0, %s291
      %s294 = sphi 0, %s293
      %s308 = sphi 0, %s294
      %s312 = sphi 0, %s312
      %s314 = sphi 0, %s312
      %s315 = sphi 0, %s314
      %s329 = sphi 0, %s315
      %s335 = sphi 0, %s337
      %s338 = sphi 0, %s335
      %s339 = sphi 0, %s338
      %s355 = sphi 0, %s339
    $region4: #{tpu_custom_call.1} parent=1 // loop_header_branch
      %29 = sbr.rel (%p27) target = $region8
    $region5: #{tpu_custom_call.1} parent=1 // loop_body
      %s31 = ssub.s32 %s26, 1
      %s32 = ssub.s32 %s26, 2
      %s33 = sadd.s32 %s26, 1
      %s34 = ssub.s32 %s26, %s33
      %p35 = scmp.eq.s32.totalorder %s34, 0
      %s37 = sadd.s32 %s36, 1
      %s38 = scalar_select %p35, %s36, %s37
      %p41 = pneg %p35
      %p42 = scmp.eq.s32.totalorder %s26, 1
      %p43 = por %p41, %p42
      %p44 = scmp.ne.s32.totalorder %s36, %s39
      %p45 = scmp.eq.s32.totalorder %s26, 0
      %p46 = por %p44, %p45
      %p47 = scmp.ne.s32.totalorder %s36, %s39
      %p48 = scmp.eq.s32.totalorder %s31, 1
      %p49 = por %p47, %p48
      %p50 = scmp.ne.s32.totalorder %s39, %s40
      %p51 = scmp.eq.s32.totalorder %s31, 0
      %p52 = por %p50, %p51
      %p53 = scmp.ne.s32.totalorder %s39, %s40
      %p54 = scmp.eq.s32.totalorder %s32, 1
      %p55 = por %p53, %p54
      %p57 = scmp.ne.s32.totalorder %s40, %s56
      %p58 = scmp.eq.s32.totalorder %s32, 0
      %p59 = por %p57, %p58
      %s61 = sadd.s32 %s60, 1
      %p64 = scmp.eq.s32.totalorder %s26, 1
      %p65 = scmp.ne.s32.totalorder %s60, %s62
      %p66 = scmp.eq.s32.totalorder %s26, 0
      %p67 = por %p65, %p66
      %p68 = scmp.ne.s32.totalorder %s60, %s62
      %p69 = scmp.eq.s32.totalorder %s31, 1
      %p70 = por %p68, %p69
      %p71 = scmp.ne.s32.totalorder %s62, %s63
      %p72 = scmp.eq.s32.totalorder %s31, 0
      %p73 = por %p71, %p72
      %p74 = scmp.ne.s32.totalorder %s62, %s63
      %p75 = scmp.eq.s32.totalorder %s32, 1
      %p76 = por %p74, %p75
      %p78 = scmp.ne.s32.totalorder %s63, %s77
      %p79 = scmp.eq.s32.totalorder %s32, 0
      %p80 = por %p78, %p79
      %s82 = sadd.s32 %s81, 1
      %p85 = scmp.eq.s32.totalorder %s26, 1
      %p86 = scmp.ne.s32.totalorder %s81, %s83
      %p87 = scmp.eq.s32.totalorder %s26, 0
      %p88 = por %p86, %p87
      %p89 = scmp.ne.s32.totalorder %s81, %s83
      %p90 = scmp.eq.s32.totalorder %s31, 1
      %p91 = por %p89, %p90
      %p92 = scmp.ne.s32.totalorder %s83, %s84
      %p93 = scmp.eq.s32.totalorder %s31, 0
      %p94 = por %p92, %p93
      %p95 = scmp.ne.s32.totalorder %s83, %s84
      %p96 = scmp.eq.s32.totalorder %s32, 1
      %p97 = por %p95, %p96
      %p99 = scmp.ne.s32.totalorder %s84, %s98
      %p100 = scmp.eq.s32.totalorder %s32, 0
      %p101 = por %p99, %p100
      %s103 = sadd.s32 %s102, 1
      %p106 = scmp.eq.s32.totalorder %s26, 1
      %p107 = scmp.ne.s32.totalorder %s102, %s104
      %p108 = scmp.eq.s32.totalorder %s26, 0
      %p109 = por %p107, %p108
      %p110 = scmp.ne.s32.totalorder %s102, %s104
      %p111 = scmp.eq.s32.totalorder %s31, 1
      %p112 = por %p110, %p111
      %p113 = scmp.ne.s32.totalorder %s104, %s105
      %p114 = scmp.eq.s32.totalorder %s31, 0
      %p115 = por %p113, %p114
      %p116 = scmp.ne.s32.totalorder %s104, %s105
      %p117 = scmp.eq.s32.totalorder %s32, 1
      %p118 = por %p116, %p117
      %p120 = scmp.ne.s32.totalorder %s105, %s119
      %p121 = scmp.eq.s32.totalorder %s32, 0
      %p122 = por %p120, %p121
      %s124 = sadd.s32 %s123, 1
      %p127 = scmp.eq.s32.totalorder %s26, 1
      %p128 = scmp.ne.s32.totalorder %s123, %s125
      %p129 = scmp.eq.s32.totalorder %s26, 0
      %p130 = por %p128, %p129
      %p131 = scmp.ne.s32.totalorder %s123, %s125
      %p132 = scmp.eq.s32.totalorder %s31, 1
      %p133 = por %p131, %p132
      %p134 = scmp.ne.s32.totalorder %s125, %s126
      %p135 = scmp.eq.s32.totalorder %s31, 0
      %p136 = por %p134, %p135
      %p137 = scmp.ne.s32.totalorder %s125, %s126
      %p138 = scmp.eq.s32.totalorder %s32, 1
      %p139 = por %p137, %p138
      %p141 = scmp.ne.s32.totalorder %s126, %s140
      %p142 = scmp.eq.s32.totalorder %s32, 0
      %p143 = por %p141, %p142
      %s145 = sadd.s32 %s144, 1
      %p148 = scmp.eq.s32.totalorder %s26, 1
      %p149 = scmp.ne.s32.totalorder %s144, %s146
      %p150 = scmp.eq.s32.totalorder %s26, 0
      %p151 = por %p149, %p150
      %p152 = scmp.ne.s32.totalorder %s144, %s146
      %p153 = scmp.eq.s32.totalorder %s31, 1
      %p154 = por %p152, %p153
      %p155 = scmp.ne.s32.totalorder %s146, %s147
      %p156 = scmp.eq.s32.totalorder %s31, 0
      %p157 = por %p155, %p156
      %p158 = scmp.ne.s32.totalorder %s146, %s147
      %p159 = scmp.eq.s32.totalorder %s32, 1
      %p160 = por %p158, %p159
      %p162 = scmp.ne.s32.totalorder %s147, %s161
      %p163 = scmp.eq.s32.totalorder %s32, 0
      %p164 = por %p162, %p163
      %s166 = sadd.s32 %s165, 1
      %p169 = scmp.eq.s32.totalorder %s26, 1
      %p170 = scmp.ne.s32.totalorder %s165, %s167
      %p171 = scmp.eq.s32.totalorder %s26, 0
      %p172 = por %p170, %p171
      %p173 = scmp.ne.s32.totalorder %s165, %s167
      %p174 = scmp.eq.s32.totalorder %s31, 1
      %p175 = por %p173, %p174
      %p176 = scmp.ne.s32.totalorder %s167, %s168
      %p177 = scmp.eq.s32.totalorder %s31, 0
      %p178 = por %p176, %p177
      %p179 = scmp.ne.s32.totalorder %s167, %s168
      %p180 = scmp.eq.s32.totalorder %s32, 1
      %p181 = por %p179, %p180
      %p183 = scmp.ne.s32.totalorder %s168, %s182
      %p184 = scmp.eq.s32.totalorder %s32, 0
      %p185 = por %p183, %p184
      %s187 = sadd.s32 %s186, 1
      %p190 = scmp.eq.s32.totalorder %s26, 1
      %p191 = scmp.ne.s32.totalorder %s186, %s188
      %p192 = scmp.eq.s32.totalorder %s26, 0
      %p193 = por %p191, %p192
      %p194 = scmp.ne.s32.totalorder %s186, %s188
      %p195 = scmp.eq.s32.totalorder %s31, 1
      %p196 = por %p194, %p195
      %p197 = scmp.ne.s32.totalorder %s188, %s189
      %p198 = scmp.eq.s32.totalorder %s31, 0
      %p199 = por %p197, %p198
      %p200 = scmp.ne.s32.totalorder %s188, %s189
      %p201 = scmp.eq.s32.totalorder %s32, 1
      %p202 = por %p200, %p201
      %p204 = scmp.ne.s32.totalorder %s189, %s203
      %p205 = scmp.eq.s32.totalorder %s32, 0
      %p206 = por %p204, %p205
      %s208 = sadd.s32 %s207, 1
      %p211 = scmp.eq.s32.totalorder %s26, 1
      %p212 = scmp.ne.s32.totalorder %s207, %s209
      %p213 = scmp.eq.s32.totalorder %s26, 0
      %p214 = por %p212, %p213
      %p215 = scmp.ne.s32.totalorder %s207, %s209
      %p216 = scmp.eq.s32.totalorder %s31, 1
      %p217 = por %p215, %p216
      %p218 = scmp.ne.s32.totalorder %s209, %s210
      %p219 = scmp.eq.s32.totalorder %s31, 0
      %p220 = por %p218, %p219
      %p221 = scmp.ne.s32.totalorder %s209, %s210
      %p222 = scmp.eq.s32.totalorder %s32, 1
      %p223 = por %p221, %p222
      %p225 = scmp.ne.s32.totalorder %s210, %s224
      %p226 = scmp.eq.s32.totalorder %s32, 0
      %p227 = por %p225, %p226
      %s229 = sadd.s32 %s228, 1
      %p232 = scmp.eq.s32.totalorder %s26, 1
      %p233 = scmp.ne.s32.totalorder %s228, %s230
      %p234 = scmp.eq.s32.totalorder %s26, 0
      %p235 = por %p233, %p234
      %p236 = scmp.ne.s32.totalorder %s228, %s230
      %p237 = scmp.eq.s32.totalorder %s31, 1
      %p238 = por %p236, %p237
      %p239 = scmp.ne.s32.totalorder %s230, %s231
      %p240 = scmp.eq.s32.totalorder %s31, 0
      %p241 = por %p239, %p240
      %p242 = scmp.ne.s32.totalorder %s230, %s231
      %p243 = scmp.eq.s32.totalorder %s32, 1
      %p244 = por %p242, %p243
      %p246 = scmp.ne.s32.totalorder %s231, %s245
      %p247 = scmp.eq.s32.totalorder %s32, 0
      %p248 = por %p246, %p247
      %s250 = sadd.s32 %s249, 1
      %p253 = scmp.eq.s32.totalorder %s26, 1
      %p254 = scmp.ne.s32.totalorder %s249, %s251
      %p255 = scmp.eq.s32.totalorder %s26, 0
      %p256 = por %p254, %p255
      %p257 = scmp.ne.s32.totalorder %s249, %s251
      %p258 = scmp.eq.s32.totalorder %s31, 1
      %p259 = por %p257, %p258
      %p260 = scmp.ne.s32.totalorder %s251, %s252
      %p261 = scmp.eq.s32.totalorder %s31, 0
      %p262 = por %p260, %p261
      %p263 = scmp.ne.s32.totalorder %s251, %s252
      %p264 = scmp.eq.s32.totalorder %s32, 1
      %p265 = por %p263, %p264
      %p267 = scmp.ne.s32.totalorder %s252, %s266
      %p268 = scmp.eq.s32.totalorder %s32, 0
      %p269 = por %p267, %p268
      %s271 = sadd.s32 %s270, 1
      %p274 = scmp.eq.s32.totalorder %s26, 1
      %p275 = scmp.ne.s32.totalorder %s270, %s272
      %p276 = scmp.eq.s32.totalorder %s26, 0
      %p277 = por %p275, %p276
      %p278 = scmp.ne.s32.totalorder %s270, %s272
      %p279 = scmp.eq.s32.totalorder %s31, 1
      %p280 = por %p278, %p279
      %p281 = scmp.ne.s32.totalorder %s272, %s273
      %p282 = scmp.eq.s32.totalorder %s31, 0
      %p283 = por %p281, %p282
      %p284 = scmp.ne.s32.totalorder %s272, %s273
      %p285 = scmp.eq.s32.totalorder %s32, 1
      %p286 = por %p284, %p285
      %p288 = scmp.ne.s32.totalorder %s273, %s287
      %p289 = scmp.eq.s32.totalorder %s32, 0
      %p290 = por %p288, %p289
      %s292 = sadd.s32 %s291, 1
      %p295 = scmp.eq.s32.totalorder %s26, 1
      %p296 = scmp.ne.s32.totalorder %s291, %s293
      %p297 = scmp.eq.s32.totalorder %s26, 0
      %p298 = por %p296, %p297
      %p299 = scmp.ne.s32.totalorder %s291, %s293
      %p300 = scmp.eq.s32.totalorder %s31, 1
      %p301 = por %p299, %p300
      %p302 = scmp.ne.s32.totalorder %s293, %s294
      %p303 = scmp.eq.s32.totalorder %s31, 0
      %p304 = por %p302, %p303
      %p305 = scmp.ne.s32.totalorder %s293, %s294
      %p306 = scmp.eq.s32.totalorder %s32, 1
      %p307 = por %p305, %p306
      %p309 = scmp.ne.s32.totalorder %s294, %s308
      %p310 = scmp.eq.s32.totalorder %s32, 0
      %p311 = por %p309, %p310
      %s313 = sadd.s32 %s312, 1
      %p316 = scmp.eq.s32.totalorder %s26, 1
      %p317 = scmp.ne.s32.totalorder %s312, %s314
      %p318 = scmp.eq.s32.totalorder %s26, 0
      %p319 = por %p317, %p318
      %p320 = scmp.ne.s32.totalorder %s312, %s314
      %p321 = scmp.eq.s32.totalorder %s31, 1
      %p322 = por %p320, %p321
      %p323 = scmp.ne.s32.totalorder %s314, %s315
      %p324 = scmp.eq.s32.totalorder %s31, 0
      %p325 = por %p323, %p324
      %p326 = scmp.ne.s32.totalorder %s314, %s315
      %p327 = scmp.eq.s32.totalorder %s32, 1
      %p328 = por %p326, %p327
      %p330 = scmp.ne.s32.totalorder %s315, %s329
      %p331 = scmp.eq.s32.totalorder %s32, 0
      %p332 = por %p330, %p331
      %s333 = ssub.s32 %s26, %s33
      %p334 = scmp.eq.s32.totalorder %s333, 0
      %s336 = sadd.s32 %s335, 1
      %s337 = scalar_select %p334, %s335, %s336
      %p340 = pneg %p334
      %p341 = scmp.eq.s32.totalorder %s26, 1
      %p342 = por %p340, %p341
      %p343 = scmp.ne.s32.totalorder %s335, %s338
      %p344 = scmp.eq.s32.totalorder %s26, 0
      %p345 = por %p343, %p344
      %p346 = scmp.ne.s32.totalorder %s335, %s338
      %p347 = scmp.eq.s32.totalorder %s31, 1
      %p348 = por %p346, %p347
      %p349 = scmp.ne.s32.totalorder %s338, %s339
      %p350 = scmp.eq.s32.totalorder %s31, 0
      %p351 = por %p349, %p350
      %p352 = scmp.ne.s32.totalorder %s338, %s339
      %p353 = scmp.eq.s32.totalorder %s32, 1
      %p354 = por %p352, %p353
      %p356 = scmp.ne.s32.totalorder %s339, %s355
      %p357 = scmp.eq.s32.totalorder %s32, 0
      %p358 = por %p356, %p357
      %p359 = scmp.le.s32.totalorder 1, %s26
      %p360 = scmp.lt.s32.totalorder %s26, 3
      %p361 = pnand %p359, %p360
      %p362 = pneg %p361
      // Predicated region
      $region9: #{tpu_custom_call.1} parent=5 // pred_check
        _
      $region10: #{tpu_custom_call.1} parent=5 // pred_check_branch
        %364 = sbr.rel (%p361) target = $region12
      $region11: #{tpu_custom_call.1} parent=5 // pred_region
        %s365 = ssub.s32 %s26, 1
        // Predicated region
        $region13: #{tpu_custom_call.1} parent=11 // pred_check
          %p366 = pneg %p73
        $region14: #{tpu_custom_call.1} parent=11 // pred_check_branch
          %368 = sbr.rel (%p366) target = $region16
        $region15: #{tpu_custom_call.1} parent=11 // pred_region
          _
        $region16: #{tpu_custom_call.1} parent=11 // pred_fallthru
          _
        // Predicated region
        $region17: #{tpu_custom_call.1} parent=11 // pred_check
          %p369 = pneg %p94
        $region18: #{tpu_custom_call.1} parent=11 // pred_check_branch
          %371 = sbr.rel (%p369) target = $region20
        $region19: #{tpu_custom_call.1} parent=11 // pred_region
          %s373 = ssub.s32 16, 16
          %374 = vsyncadd [#allocation3], %s373
          %s376 = sshll.u32 [#allocation2], 4
          %s377 = int_to_ptr.vmem [resolvable:$true] %s376
          %379 = dma.hbm_to_vmem [thread:$0]  %s2, 16, %s377, [#allocation3]
        $region20: #{tpu_custom_call.1} parent=11 // pred_fallthru
          _
        // Predicated region
        $region21: #{tpu_custom_call.1} parent=11 // pred_check
          %p380 = pneg %p115
        $region22: #{tpu_custom_call.1} parent=11 // pred_check_branch
          %382 = sbr.rel (%p380) target = $region24
        $region23: #{tpu_custom_call.1} parent=11 // pred_region
          %s384 = ssub.s32 1536, 1536
          %385 = vsyncadd [#allocation6], %s384
          %s386 = sshll.u32 [#allocation5], 4
          %s387 = int_to_ptr.vmem [resolvable:$true] %s386
          %392 = dma.hbm_to_vmem [thread:$0]  %s3, 1536, %s387, [#allocation6], 64, 64, 4
        $region24: #{tpu_custom_call.1} parent=11 // pred_fallthru
          _
        // Predicated region
        $region25: #{tpu_custom_call.1} parent=11 // pred_check
          %p393 = pneg %p136
        $region26: #{tpu_custom_call.1} parent=11 // pred_check_branch
          %395 = sbr.rel (%p393) target = $region28
        $region27: #{tpu_custom_call.1} parent=11 // pred_region
          %s397 = ssub.s32 16, 16
          %398 = vsyncadd [#allocation6], %s397
          %s400 = sshll.u32 [#allocation7], 4
          %s401 = int_to_ptr.vmem [resolvable:$true] %s400
          %403 = dma.hbm_to_vmem [thread:$0]  %s4, 16, %s401, [#allocation6]
        $region28: #{tpu_custom_call.1} parent=11 // pred_fallthru
          _
        // Predicated region
        $region29: #{tpu_custom_call.1} parent=11 // pred_check
          %p404 = pneg %p157
        $region30: #{tpu_custom_call.1} parent=11 // pred_check_branch
          %406 = sbr.rel (%p404) target = $region32
        $region31: #{tpu_custom_call.1} parent=11 // pred_region
          %s408 = ssub.s32 6144, 6144
          %409 = vsyncadd [#allocation9], %s408
          %s410 = sshll.u32 [#allocation8], 4
          %s411 = int_to_ptr.vmem [resolvable:$true] %s410
          %416 = dma.hbm_to_vmem [thread:$0]  %s5, 6144, %s411, [#allocation9], 128, 128, 8
        $region32: #{tpu_custom_call.1} parent=11 // pred_fallthru
          _
        // Predicated region
        $region33: #{tpu_custom_call.1} parent=11 // pred_check
          %p417 = pneg %p178
        $region34: #{tpu_custom_call.1} parent=11 // pred_check_branch
          %419 = sbr.rel (%p417) target = $region36
        $region35: #{tpu_custom_call.1} parent=11 // pred_region
          _
        $region36: #{tpu_custom_call.1} parent=11 // pred_fallthru
          _
        // Predicated region
        $region37: #{tpu_custom_call.1} parent=11 // pred_check
          %p420 = pneg %p199
        $region38: #{tpu_custom_call.1} parent=11 // pred_check_branch
          %422 = sbr.rel (%p420) target = $region40
        $region39: #{tpu_custom_call.1} parent=11 // pred_region
          _
        $region40: #{tpu_custom_call.1} parent=11 // pred_fallthru
          _
        // Predicated region
        $region41: #{tpu_custom_call.1} parent=11 // pred_check
          %p423 = pneg %p220
        $region42: #{tpu_custom_call.1} parent=11 // pred_check_branch
          %425 = sbr.rel (%p423) target = $region44
        $region43: #{tpu_custom_call.1} parent=11 // pred_region
          %s427 = ssub.s32 16, 16
          %428 = vsyncadd [#allocation9], %s427
          %s430 = sshll.u32 [#allocation10], 4
          %s431 = int_to_ptr.vmem [resolvable:$true] %s430
          %433 = dma.hbm_to_vmem [thread:$0]  %s8, 16, %s431, [#allocation9]
        $region44: #{tpu_custom_call.1} parent=11 // pred_fallthru
          _
        // Predicated region
        $region45: #{tpu_custom_call.1} parent=11 // pred_check
          %p434 = pneg %p241
        $region46: #{tpu_custom_call.1} parent=11 // pred_check_branch
          %436 = sbr.rel (%p434) target = $region48
        $region47: #{tpu_custom_call.1} parent=11 // pred_region
          _
        $region48: #{tpu_custom_call.1} parent=11 // pred_fallthru
          _
        // Predicated region
        $region49: #{tpu_custom_call.1} parent=11 // pred_check
          %p437 = pneg %p262
        $region50: #{tpu_custom_call.1} parent=11 // pred_check_branch
          %439 = sbr.rel (%p437) target = $region52
        $region51: #{tpu_custom_call.1} parent=11 // pred_region
          _
        $region52: #{tpu_custom_call.1} parent=11 // pred_fallthru
          _
        // Predicated region
        $region53: #{tpu_custom_call.1} parent=11 // pred_check
          %p440 = pneg %p283
        $region54: #{tpu_custom_call.1} parent=11 // pred_check_branch
          %442 = sbr.rel (%p440) target = $region56
        $region55: #{tpu_custom_call.1} parent=11 // pred_region
          _
        $region56: #{tpu_custom_call.1} parent=11 // pred_fallthru
          _
        // Predicated region
        $region57: #{tpu_custom_call.1} parent=11 // pred_check
          %p443 = pneg %p304
        $region58: #{tpu_custom_call.1} parent=11 // pred_check_branch
          %445 = sbr.rel (%p443) target = $region60
        $region59: #{tpu_custom_call.1} parent=11 // pred_region
          _
        $region60: #{tpu_custom_call.1} parent=11 // pred_fallthru
          _
        // Predicated region
        $region61: #{tpu_custom_call.1} parent=11 // pred_check
          %p446 = pneg %p325
        $region62: #{tpu_custom_call.1} parent=11 // pred_check_branch
          %448 = sbr.rel (%p446) target = $region64
        $region63: #{tpu_custom_call.1} parent=11 // pred_region
          _
        $region64: #{tpu_custom_call.1} parent=11 // pred_fallthru
          _
      $region12: #{tpu_custom_call.1} parent=5 // pred_fallthru
        _
      %p449 = scmp.lt.s32.totalorder %s26, 2
      // Predicated region
      $region65: #{tpu_custom_call.1} parent=5 // pred_check
        %p450 = pneg %p449
      $region66: #{tpu_custom_call.1} parent=5 // pred_check_branch
        %452 = sbr.rel (%p450) target = $region68
      $region67: #{tpu_custom_call.1} parent=5 // pred_region
        // Predicated region
        $region69: #{tpu_custom_call.1} parent=67 // pred_check
          %p453 = pneg %p46
        $region70: #{tpu_custom_call.1} parent=67 // pred_check_branch
          %455 = sbr.rel (%p453) target = $region72
        $region71: #{tpu_custom_call.1} parent=67 // pred_region
          %s456 = smul.u32 2, %s26
          %p457 = scmp.lt.s32.totalorder %s456, 3
          %s458 = scalar_select %p457, %s456, 3
          %s459 = smul.addr %s458, 2
          %s460 = smul.addr %s459, 8
          %s461 = scalar_lea.vmem %s0, %s460
          %s462 = smul.u32 2, %s26
        $region72: #{tpu_custom_call.1} parent=67 // pred_fallthru
          _
      $region68: #{tpu_custom_call.1} parent=5 // pred_fallthru
        _
      %p463 = scmp.le.s32.totalorder 1, %s26
      %p464 = scmp.lt.s32.totalorder %s26, 3
      %p465 = pnand %p463, %p464
      %p466 = pneg %p465
      // Predicated region
      $region73: #{tpu_custom_call.1} parent=5 // pred_check
        _
      $region74: #{tpu_custom_call.1} parent=5 // pred_check_branch
        %468 = sbr.rel (%p465) target = $region76
      $region75: #{tpu_custom_call.1} parent=5 // pred_region
        %s469 = ssub.s32 %s26, 1
        // Predicated region
        $region77: #{tpu_custom_call.1} parent=75 // pred_check
          %p470 = pneg %p94
        $region78: #{tpu_custom_call.1} parent=75 // pred_check_branch
          %472 = sbr.rel (%p470) target = $region80
        $region79: #{tpu_custom_call.1} parent=75 // pred_region
          %473 = dma.done [#allocation3], 16
        $region80: #{tpu_custom_call.1} parent=75 // pred_fallthru
          _
        // Predicated region
        $region81: #{tpu_custom_call.1} parent=75 // pred_check
          %p474 = pneg %p115
        $region82: #{tpu_custom_call.1} parent=75 // pred_check_branch
          %476 = sbr.rel (%p474) target = $region84
        $region83: #{tpu_custom_call.1} parent=75 // pred_region
          %477 = dma.done [#allocation6], 1536
        $region84: #{tpu_custom_call.1} parent=75 // pred_fallthru
          _
        // Predicated region
        $region85: #{tpu_custom_call.1} parent=75 // pred_check
          %p478 = pneg %p136
        $region86: #{tpu_custom_call.1} parent=75 // pred_check_branch
          %480 = sbr.rel (%p478) target = $region88
        $region87: #{tpu_custom_call.1} parent=75 // pred_region
          %481 = dma.done [#allocation6], 16
        $region88: #{tpu_custom_call.1} parent=75 // pred_fallthru
          _
        // Predicated region
        $region89: #{tpu_custom_call.1} parent=75 // pred_check
          %p482 = pneg %p157
        $region90: #{tpu_custom_call.1} parent=75 // pred_check_branch
          %484 = sbr.rel (%p482) target = $region92
        $region91: #{tpu_custom_call.1} parent=75 // pred_region
          %485 = dma.done [#allocation9], 6144
        $region92: #{tpu_custom_call.1} parent=75 // pred_fallthru
          _
        // Predicated region
        $region93: #{tpu_custom_call.1} parent=75 // pred_check
          %p486 = pneg %p220
        $region94: #{tpu_custom_call.1} parent=75 // pred_check_branch
          %488 = sbr.rel (%p486) target = $region96
        $region95: #{tpu_custom_call.1} parent=75 // pred_region
          %489 = dma.done [#allocation9], 16
        $region96: #{tpu_custom_call.1} parent=75 // pred_fallthru
          _
        %s490 = smul.u32 2, %s31
        %p491 = scmp.lt.s32.totalorder %s490, 3
        %s492 = scalar_select %p491, %s490, 3
        %s493 = smul.addr %s492, 2
        %s494 = smul.addr %s493, 8
        %s495 = scalar_lea.vmem %s0, %s494
        %p496 = pneg %p52
        %p497 = pneg %p49
        %p498 = pneg %p73
        %p499 = pneg %p70
        %p500 = pneg %p94
        %p501 = pneg %p91
        %p502 = pneg %p115
        %p503 = pneg %p112
        %p504 = pneg %p136
        %p505 = pneg %p133
        %p506 = pneg %p157
        %p507 = pneg %p154
        %p508 = pneg %p178
        %p509 = pneg %p175
        %p510 = pneg %p199
        %p511 = pneg %p196
        %p512 = pneg %p220
        %p513 = pneg %p217
        %p514 = pneg %p241
        %p515 = pneg %p238
        %p516 = pneg %p262
        %p517 = pneg %p259
        %p518 = pneg %p283
        %p519 = pneg %p280
        %p520 = pneg %p304
        %p521 = pneg %p301
        %p522 = pneg %p325
        %p523 = pneg %p322
        %p524 = pneg %p351
        %p525 = pneg %p348
        %s526 = sand.u32 %s338, 1
        %s527 = scalar_lea.sflag [#allocation4], %s526
        %s528 = sand.u32 %s338, 1
        %s529 = smul.addr %s528, 2
        %s530 = scalar_lea.vmem [#allocation11], %s529
        %s531 = smul.u32 2, %s31
        %p532 = scmp.lt.s32.totalorder %s531, 3
        %s533 = scalar_select %p532, %s531, 3
        %s534 = smul.addr %s533, 2
        %s535 = smul.addr %s534, 8
        %s536 = scalar_lea.vmem %s0, %s535
        %s537 = smul.u32 2, %s31
        %v542 = vld [vmem:[%s536] sm:$0xff]
        %v543 = vld [vmem:[%s536 + $0x8] sm:$0xff]
        %v544 = vld [vmem:[%s536 + $0x10] sm:$0xff]
        %v545 = vld [vmem:[%s536 + $0x18] sm:$0xff]
        %vm550 = vcmask 1040384
        %v551 = vrot.slane %v542, 7
        %v552 = vrot.slane %v543, 7
        %v553 = vsel %vm550, %v551, %v552
        %v554 = vrot.slane %v544, 7
        %v555 = vsel %vm550, %v552, %v554
        %v556 = vrot.slane %v545, 7
        %v557 = vsel %vm550, %v554, %v556
        %v562 = vsel %vm550, 0.0, %v551
        %vm563 = vcmask 1046528
        %v564 = vrot.slane %v542, 1
        %v565 = vrot.slane %v543, 1
        %v566 = vsel %vm563, %v564, %v565
        %v567 = vrot.slane %v544, 1
        %v568 = vsel %vm563, %v565, %v567
        %v569 = vrot.slane %v545, 1
        %v570 = vsel %vm563, %v567, %v569
        %v575 = vsel %vm563, %v569, 0.0
        %v576 = vlaneseq
        %v577 = vshrl.u32 %v576, 7
        %v578 = vadd.s32 %v577, 8
        %v579 = vadd.s32 %v577, 16
        %v580 = vadd.s32 %v577, 24
        %vm581 = vcmp.lt.s32.totalorder %v577, 0
        %v582 = vsub.s32 0, %v577
        %v583 = vsel %vm581, %v582, %v577
        %v584 = vshrl.u32 %v583, 4
        %v585 = vand.u32 %v583, 15
        %v586 = vsub.s32 0, %v585
        %v587 = vsel %vm581, %v586, %v585
        %vm588 = vcmp.lt.s32.totalorder %v578, 0
        %v589 = vsub.s32 0, %v578
        %v590 = vsel %vm588, %v589, %v578
        %v591 = vshrl.u32 %v590, 4
        %v592 = vand.u32 %v590, 15
        %v593 = vsub.s32 0, %v592
        %v594 = vsel %vm588, %v593, %v592
        %vm595 = vcmp.lt.s32.totalorder %v579, 0
        %v596 = vsub.s32 0, %v579
        %v597 = vsel %vm595, %v596, %v579
        %v598 = vshrl.u32 %v597, 4
        %v599 = vand.u32 %v597, 15
        %v600 = vsub.s32 0, %v599
        %v601 = vsel %vm595, %v600, %v599
        %vm602 = vcmp.lt.s32.totalorder %v580, 0
        %v603 = vsub.s32 0, %v580
        %v604 = vsel %vm602, %v603, %v580
        %v605 = vshrl.u32 %v604, 4
        %v606 = vand.u32 %v604, 15
        %v607 = vsub.s32 0, %v606
        %v608 = vsel %vm602, %v607, %v606
        %vm609 = vcmp.ne.s32.totalorder %v587, 0
        %vm610 = vcmp.ne.s32.totalorder %v594, 0
        %vm611 = vcmp.ne.s32.totalorder %v601, 0
        %vm612 = vcmp.ne.s32.totalorder %v608, 0
        %vm613 = vcmp.lt.s32.totalorder %v587, 0
        %vm614 = vcmp.lt.s32.totalorder %v594, 0
        %vm615 = vcmp.lt.s32.totalorder %v601, 0
        %vm616 = vcmp.lt.s32.totalorder %v608, 0
        %vm617 = vmand %vm613, %vm609
        %vm618 = vmand %vm614, %vm610
        %vm619 = vmand %vm615, %vm611
        %vm620 = vmand %vm616, %vm612
        %v621 = vadd.s32 %v587, 16
        %v622 = vadd.s32 %v594, 16
        %v623 = vadd.s32 %v601, 16
        %v624 = vadd.s32 %v608, 16
        %v625 = vsel %vm617, %v621, %v587
        %v626 = vsel %vm618, %v622, %v594
        %v627 = vsel %vm619, %v623, %v601
        %v628 = vsel %vm620, %v624, %v608
        %vm629 = vcmp.gt.s32.totalorder %v625, 0
        %vm630 = vcmp.gt.s32.totalorder %v626, 0
        %vm631 = vcmp.gt.s32.totalorder %v627, 0
        %vm632 = vcmp.gt.s32.totalorder %v628, 0
        %v633 = vsel %vm629, 1, 0
        %v634 = vsel %vm630, 1, 0
        %v635 = vsel %vm631, 1, 0
        %v636 = vsel %vm632, 1, 0
        %vm637 = vcmp.eq.s32.totalorder %v633, 1
        %vm638 = vcmp.eq.s32.totalorder %v634, 1
        %vm639 = vcmp.eq.s32.totalorder %v635, 1
        %vm640 = vcmp.eq.s32.totalorder %v636, 1
        %v641 = vsel %vm637, %v562, 0.0
        %v642 = vsel %vm638, %v553, 0.0
        %v643 = vsel %vm639, %v555, 0.0
        %v644 = vsel %vm640, %v557, 0.0
        %vm645 = vcmp.lt.s32.totalorder %v625, 15
        %vm646 = vcmp.lt.s32.totalorder %v626, 15
        %vm647 = vcmp.lt.s32.totalorder %v627, 15
        %vm648 = vcmp.lt.s32.totalorder %v628, 15
        %v649 = vsel %vm645, 1, 0
        %v650 = vsel %vm646, 1, 0
        %v651 = vsel %vm647, 1, 0
        %v652 = vsel %vm648, 1, 0
        %vm653 = vcmp.eq.s32.totalorder %v649, 1
        %vm654 = vcmp.eq.s32.totalorder %v650, 1
        %vm655 = vcmp.eq.s32.totalorder %v651, 1
        %vm656 = vcmp.eq.s32.totalorder %v652, 1
        %v657 = vsel %vm653, %v566, 0.0
        %v658 = vsel %vm654, %v568, 0.0
        %v659 = vsel %vm655, %v570, 0.0
        %v660 = vsel %vm656, %v575, 0.0
        %v661 = vld [vmem:[%s1] sm:$0xf]
        %s662 = scalar_lea.vmem %s1, 4
        %v663 = vld [vmem:[%s662] sm:$0xf]
        %vm664 = vcmask 31744
        %v665 = vsel %vm664, %v542, 0
        %v667 = vsel %vm664, %v543, 0
        %v669 = vsel %vm664, %v544, 0
        %v671 = vsel %vm664, %v545, 0
        %vm673 = vcmask 1043456
        %v675 = vsel %vm673, %v663, 0
        %677 = vmatprep.subr.mxu0 0.0
        %678 = vmatpush1.msra.mxu0 %v675
        %679 = vmatprep.subr.mxu0 0.0
        %680 = vmatpush1.msra.mxu0 0.0
        %681 = vmatprep.subr.mxu0 0.0
        %682 = vmatpush1.msra.mxu0 0.0
        %683 = vmatprep.subr.mxu0 0.0
        %684 = vmatpush1.msra.mxu0 0.0
        %685 = vmatprep.subr.mxu0 0.0
        %686 = vmatpush1.msra.mxu0 0.0
        %687 = vmatprep.subr.mxu0 0.0
        %688 = vmatpush1.msra.mxu0 0.0
        %689 = vmatprep.subr.mxu0 0.0
        %690 = vmatpush1.msra.mxu0 0.0
        %691 = vmatprep.subr.mxu0 0.0
        %692 = vmatpush1.msra.mxu0 0.0
        %693 = vmatprep.subr.mxu0 0.0
        %694 = vmatpush1.msra.mxu0 0.0
        %695 = vmatprep.subr.mxu0 0.0
        %696 = vmatpush1.msra.mxu0 0.0
        %697 = vmatprep.subr.mxu0 0.0
        %698 = vmatpush1.msra.mxu0 0.0
        %699 = vmatprep.subr.mxu0 0.0
        %700 = vmatpush1.msra.mxu0 0.0
        %701 = vmatprep.subr.mxu0 0.0
        %702 = vmatpush1.msra.mxu0 0.0
        %703 = vmatprep.subr.mxu0 0.0
        %704 = vmatpush1.msra.mxu0 0.0
        %705 = vmatprep.subr.mxu0 0.0
        %706 = vmatpush1.msra.mxu0 0.0
        %707 = vmatprep.subr.mxu0 0.0
        %708 = vmatpush1.msra.mxu0 0.0
        %709 = vmatprep.subr.mxu0 0.0
        %710 = vmatpush1.msra.mxu0 0.0
        %711 = vmatprep.subr.mxu0 0.0
        %712 = vmatpush1.msra.mxu0 0.0
        %713 = vmatprep.subr.mxu0 0.0
        %714 = vmatpush1.msra.mxu0 0.0
        %715 = vmatprep.subr.mxu0 0.0
        %716 = vmatpush1.msra.mxu0 0.0
        %717 = vmatprep.subr.mxu0 0.0
        %718 = vmatpush1.msra.mxu0 0.0
        %719 = vmatprep.subr.mxu0 0.0
        %720 = vmatpush1.msra.mxu0 0.0
        %721 = vmatprep.subr.mxu0 0.0
        %722 = vmatpush1.msra.mxu0 0.0
        %723 = vmatprep.subr.mxu0 0.0
        %724 = vmatpush1.msra.mxu0 0.0
        %725 = vmatprep.subr.mxu0 0.0
        %726 = vmatpush1.msra.mxu0 0.0
        %727 = vmatprep.subr.mxu0 0.0
        %728 = vmatpush1.msra.mxu0 0.0
        %729 = vmatprep.subr.mxu0 0.0
        %730 = vmatpush1.msra.mxu0 0.0
        %731 = vmatprep.subr.mxu0 0.0
        %732 = vmatpush1.msra.mxu0 0.0
        %733 = vmatprep.subr.mxu0 0.0
        %734 = vmatpush1.msra.mxu0 0.0
        %735 = vmatprep.subr.mxu0 0.0
        %736 = vmatpush1.msra.mxu0 0.0
        %737 = vmatprep.subr.mxu0 0.0
        %738 = vmatpush1.msra.mxu0 0.0
        %739 = vmatprep.subr.mxu0 0.0
        %740 = vmatpush1.msra.mxu0 0.0
        %741 = vmatprep.mubr.f32.mxu0 0.0
        %742 = vmatmul.mubr.f32.gmra.mrb[0].mxu0 %v665
        %v743 = vpop.f32.mrb[0].mxu0
        %v744 = vadd.f32 0.0, %v743
        %v745 = vpop.f32.mrb[0].mxu0
        %746 = vmatprep.mubr.f32.mxu0 0.0
        %747 = vmatmul.mubr.f32.gmra.mrb[0].mxu0 %v667
        %v748 = vpop.f32.mrb[0].mxu0
        %v749 = vadd.f32 0.0, %v748
        %v750 = vpop.f32.mrb[0].mxu0
        %751 = vmatprep.mubr.f32.mxu0 0.0
        %752 = vmatmul.mubr.f32.gmra.mrb[0].mxu0 %v669
        %v753 = vpop.f32.mrb[0].mxu0
        %v754 = vadd.f32 0.0, %v753
        %v755 = vpop.f32.mrb[0].mxu0
        %756 = vmatprep.mubr.f32.mxu0 0.0
        %757 = vmatmul.mubr.f32.gmra.mrb[0].mxu0 %v671
        %v758 = vpop.f32.mrb[0].mxu0
        %v759 = vadd.f32 0.0, %v758
        %v760 = vpop.f32.mrb[0].mxu0
        %761 = vdwg.mxu0
        %v763 = vsel %vm664, %v641, 0
        %v766 = vsel %vm664, %v642, 0
        %v769 = vsel %vm664, %v643, 0
        %v772 = vsel %vm664, %v644, 0
        %v775 = vsel %vm673, %v661, 0
        %777 = vmatprep.subr.mxu0 0.0
        %778 = vmatpush1.msra.mxu0 %v775
        %779 = vmatprep.subr.mxu0 0.0
        %780 = vmatpush1.msra.mxu0 0.0
        %781 = vmatprep.subr.mxu0 0.0
        %782 = vmatpush1.msra.mxu0 0.0
        %783 = vmatprep.subr.mxu0 0.0
        %784 = vmatpush1.msra.mxu0 0.0
        %785 = vmatprep.subr.mxu0 0.0
        %786 = vmatpush1.msra.mxu0 0.0
        %787 = vmatprep.subr.mxu0 0.0
        %788 = vmatpush1.msra.mxu0 0.0
        %789 = vmatprep.subr.mxu0 0.0
        %790 = vmatpush1.msra.mxu0 0.0
        %791 = vmatprep.subr.mxu0 0.0
        %792 = vmatpush1.msra.mxu0 0.0
        %793 = vmatprep.subr.mxu0 0.0
        %794 = vmatpush1.msra.mxu0 0.0
        %795 = vmatprep.subr.mxu0 0.0
        %796 = vmatpush1.msra.mxu0 0.0
        %797 = vmatprep.subr.mxu0 0.0
        %798 = vmatpush1.msra.mxu0 0.0
        %799 = vmatprep.subr.mxu0 0.0
        %800 = vmatpush1.msra.mxu0 0.0
        %801 = vmatprep.subr.mxu0 0.0
        %802 = vmatpush1.msra.mxu0 0.0
        %803 = vmatprep.subr.mxu0 0.0
        %804 = vmatpush1.msra.mxu0 0.0
        %805 = vmatprep.subr.mxu0 0.0
        %806 = vmatpush1.msra.mxu0 0.0
        %807 = vmatprep.subr.mxu0 0.0
        %808 = vmatpush1.msra.mxu0 0.0
        %809 = vmatprep.subr.mxu0 0.0
        %810 = vmatpush1.msra.mxu0 0.0
        %811 = vmatprep.subr.mxu0 0.0
        %812 = vmatpush1.msra.mxu0 0.0
        %813 = vmatprep.subr.mxu0 0.0
        %814 = vmatpush1.msra.mxu0 0.0
        %815 = vmatprep.subr.mxu0 0.0
        %816 = vmatpush1.msra.mxu0 0.0
        %817 = vmatprep.subr.mxu0 0.0
        %818 = vmatpush1.msra.mxu0 0.0
        %819 = vmatprep.subr.mxu0 0.0
        %820 = vmatpush1.msra.mxu0 0.0
        %821 = vmatprep.subr.mxu0 0.0
        %822 = vmatpush1.msra.mxu0 0.0
        %823 = vmatprep.subr.mxu0 0.0
        %824 = vmatpush1.msra.mxu0 0.0
        %825 = vmatprep.subr.mxu0 0.0
        %826 = vmatpush1.msra.mxu0 0.0
        %827 = vmatprep.subr.mxu0 0.0
        %828 = vmatpush1.msra.mxu0 0.0
        %829 = vmatprep.subr.mxu0 0.0
        %830 = vmatpush1.msra.mxu0 0.0
        %831 = vmatprep.subr.mxu0 0.0
        %832 = vmatpush1.msra.mxu0 0.0
        %833 = vmatprep.subr.mxu0 0.0
        %834 = vmatpush1.msra.mxu0 0.0
        %835 = vmatprep.subr.mxu0 0.0
        %836 = vmatpush1.msra.mxu0 0.0
        %837 = vmatprep.subr.mxu0 0.0
        %838 = vmatpush1.msra.mxu0 0.0
        %839 = vmatprep.subr.mxu0 0.0
        %840 = vmatpush1.msra.mxu0 0.0
        %841 = vmatprep.mubr.f32.mxu0 0.0
        %842 = vmatmul.mubr.f32.gmra.mrb[0].mxu0 %v763
        %v843 = vpop.f32.mrb[0].mxu0
        %v844 = vadd.f32 %v744, %v843
        %v845 = vpop.f32.mrb[0].mxu0
        %846 = vmatprep.mubr.f32.mxu0 0.0
        %847 = vmatmul.mubr.f32.gmra.mrb[0].mxu0 %v766
        %v848 = vpop.f32.mrb[0].mxu0
        %v849 = vadd.f32 %v749, %v848
        %v850 = vpop.f32.mrb[0].mxu0
        %851 = vmatprep.mubr.f32.mxu0 0.0
        %852 = vmatmul.mubr.f32.gmra.mrb[0].mxu0 %v769
        %v853 = vpop.f32.mrb[0].mxu0
        %v854 = vadd.f32 %v754, %v853
        %v855 = vpop.f32.mrb[0].mxu0
        %856 = vmatprep.mubr.f32.mxu0 0.0
        %857 = vmatmul.mubr.f32.gmra.mrb[0].mxu0 %v772
        %v858 = vpop.f32.mrb[0].mxu0
        %v859 = vadd.f32 %v759, %v858
        %v860 = vpop.f32.mrb[0].mxu0
        %861 = vdwg.mxu0
        %s862 = scalar_lea.vmem %s1, 8
        %v863 = vld [vmem:[%s862] sm:$0xf]
        %v865 = vsel %vm664, %v657, 0
        %v868 = vsel %vm664, %v658, 0
        %v871 = vsel %vm664, %v659, 0
        %v874 = vsel %vm664, %v660, 0
        %v877 = vsel %vm673, %v863, 0
        %879 = vmatprep.subr.mxu0 0.0
        %880 = vmatpush1.msra.mxu0 %v877
        %881 = vmatprep.subr.mxu0 0.0
        %882 = vmatpush1.msra.mxu0 0.0
        %883 = vmatprep.subr.mxu0 0.0
        %884 = vmatpush1.msra.mxu0 0.0
        %885 = vmatprep.subr.mxu0 0.0
        %886 = vmatpush1.msra.mxu0 0.0
        %887 = vmatprep.subr.mxu0 0.0
        %888 = vmatpush1.msra.mxu0 0.0
        %889 = vmatprep.subr.mxu0 0.0
        %890 = vmatpush1.msra.mxu0 0.0
        %891 = vmatprep.subr.mxu0 0.0
        %892 = vmatpush1.msra.mxu0 0.0
        %893 = vmatprep.subr.mxu0 0.0
        %894 = vmatpush1.msra.mxu0 0.0
        %895 = vmatprep.subr.mxu0 0.0
        %896 = vmatpush1.msra.mxu0 0.0
        %897 = vmatprep.subr.mxu0 0.0
        %898 = vmatpush1.msra.mxu0 0.0
        %899 = vmatprep.subr.mxu0 0.0
        %900 = vmatpush1.msra.mxu0 0.0
        %901 = vmatprep.subr.mxu0 0.0
        %902 = vmatpush1.msra.mxu0 0.0
        %903 = vmatprep.subr.mxu0 0.0
        %904 = vmatpush1.msra.mxu0 0.0
        %905 = vmatprep.subr.mxu0 0.0
        %906 = vmatpush1.msra.mxu0 0.0
        %907 = vmatprep.subr.mxu0 0.0
        %908 = vmatpush1.msra.mxu0 0.0
        %909 = vmatprep.subr.mxu0 0.0
        %910 = vmatpush1.msra.mxu0 0.0
        %911 = vmatprep.subr.mxu0 0.0
        %912 = vmatpush1.msra.mxu0 0.0
        %913 = vmatprep.subr.mxu0 0.0
        %914 = vmatpush1.msra.mxu0 0.0
        %915 = vmatprep.subr.mxu0 0.0
        %916 = vmatpush1.msra.mxu0 0.0
        %917 = vmatprep.subr.mxu0 0.0
        %918 = vmatpush1.msra.mxu0 0.0
        %919 = vmatprep.subr.mxu0 0.0
        %920 = vmatpush1.msra.mxu0 0.0
        %921 = vmatprep.subr.mxu0 0.0
        %922 = vmatpush1.msra.mxu0 0.0
        %923 = vmatprep.subr.mxu0 0.0
        %924 = vmatpush1.msra.mxu0 0.0
        %925 = vmatprep.subr.mxu0 0.0
        %926 = vmatpush1.msra.mxu0 0.0
        %927 = vmatprep.subr.mxu0 0.0
        %928 = vmatpush1.msra.mxu0 0.0
        %929 = vmatprep.subr.mxu0 0.0
        %930 = vmatpush1.msra.mxu0 0.0
        %931 = vmatprep.subr.mxu0 0.0
        %932 = vmatpush1.msra.mxu0 0.0
        %933 = vmatprep.subr.mxu0 0.0
        %934 = vmatpush1.msra.mxu0 0.0
        %935 = vmatprep.subr.mxu0 0.0
        %936 = vmatpush1.msra.mxu0 0.0
        %937 = vmatprep.subr.mxu0 0.0
        %938 = vmatpush1.msra.mxu0 0.0
        %939 = vmatprep.subr.mxu0 0.0
        %940 = vmatpush1.msra.mxu0 0.0
        %941 = vmatprep.subr.mxu0 0.0
        %942 = vmatpush1.msra.mxu0 0.0
        %943 = vmatprep.mubr.f32.mxu0 0.0
        %944 = vmatmul.mubr.f32.gmra.mrb[0].mxu0 %v865
        %v945 = vpop.f32.mrb[0].mxu0
        %v946 = vadd.f32 0.0, %v945
        %v947 = vpop.f32.mrb[0].mxu0
        %948 = vmatprep.mubr.f32.mxu0 0.0
        %949 = vmatmul.mubr.f32.gmra.mrb[0].mxu0 %v868
        %v950 = vpop.f32.mrb[0].mxu0
        %v951 = vadd.f32 0.0, %v950
        %v952 = vpop.f32.mrb[0].mxu0
        %953 = vmatprep.mubr.f32.mxu0 0.0
        %954 = vmatmul.mubr.f32.gmra.mrb[0].mxu0 %v871
        %v955 = vpop.f32.mrb[0].mxu0
        %v956 = vadd.f32 0.0, %v955
        %v957 = vpop.f32.mrb[0].mxu0
        %958 = vmatprep.mubr.f32.mxu0 0.0
        %959 = vmatmul.mubr.f32.gmra.mrb[0].mxu0 %v874
        %v960 = vpop.f32.mrb[0].mxu0
        %v961 = vadd.f32 0.0, %v960
        %v962 = vpop.f32.mrb[0].mxu0
        %963 = vdwg.mxu0
        %v964 = vadd.f32 %v844, %v946
        %v965 = vadd.f32 %v849, %v951
        %v966 = vadd.f32 %v854, %v956
        %v967 = vadd.f32 %v859, %v961
        %v968 = vld [vmem:[#allocation2] sm:$0x1]
        %v970 = vlaneseq
        %v971 = vshrl.u32 %v970, 7
        %v972 = vsub.s32 0, %v971
        %v973 = vrot.slane %v968, %v972
        %v975 = vadd.f32 %v964, %v973
        %v976 = vadd.f32 %v965, %v973
        %v977 = vadd.f32 %v966, %v973
        %v978 = vadd.f32 %v967, %v973
        %v979 = vmax.f32 %v975, 0.0
        %v980 = vmax.f32 %v976, 0.0
        %v981 = vmax.f32 %v977, 0.0
        %v982 = vmax.f32 %v978, 0.0
        %v983 = vpack.c.bf16 %v980, %v979
        %v984 = vpack.c.bf16 %v982, %v981
        %v987 = vcombine.high %v983, %v983
        %v989 = vunpack.c.l.s4 1966171168
        %v990 = vunpack.c.0.s8 %v989
        %v991 = vlaneseq
        %v992 = vshrl.u32 %v991, 7
        %v993 = vsub.s32 %v990, %v992
        %v994 = vrot.slane %v983, %v993
        %v996 = vunpack.c.l.s4 1966171168
        %v997 = vunpack.c.0.s8 %v996
        %v998 = vlaneseq
        %v999 = vshrl.u32 %v998, 7
        %v1000 = vsub.s32 %v997, %v999
        %v1001 = vrot.slane %v987, %v1000
        %v1002 = vcombine.high %v994, %v994
        %v1003 = vcombine.high %v1001, %v1001
        %v1005 = vunpack.c.l.s4 1966171168
        %v1006 = vunpack.c.0.s8 %v1005
        %v1007 = vlaneseq
        %v1008 = vshrl.u32 %v1007, 7
        %v1009 = vsub.s32 %v1006, %v1008
        %v1010 = vrot.slane %v994, %v1009
        %v1012 = vunpack.c.l.s4 1966171168
        %v1013 = vunpack.c.0.s8 %v1012
        %v1014 = vlaneseq
        %v1015 = vshrl.u32 %v1014, 7
        %v1016 = vsub.s32 %v1013, %v1015
        %v1017 = vrot.slane %v1001, %v1016
        %v1019 = vunpack.c.l.s4 1966171168
        %v1020 = vunpack.c.0.s8 %v1019
        %v1021 = vlaneseq
        %v1022 = vshrl.u32 %v1021, 7
        %v1023 = vsub.s32 %v1020, %v1022
        %v1024 = vrot.slane %v1002, %v1023
        %v1026 = vunpack.c.l.s4 1966171168
        %v1027 = vunpack.c.0.s8 %v1026
        %v1028 = vlaneseq
        %v1029 = vshrl.u32 %v1028, 7
        %v1030 = vsub.s32 %v1027, %v1029
        %v1031 = vrot.slane %v1003, %v1030
        %v1032 = vcombine.high %v1010, %v1010
        %v1033 = vcombine.high %v1017, %v1017
        %v1034 = vcombine.high %v1024, %v1024
        %v1035 = vcombine.high %v1031, %v1031
        %v1036 = vcombine.high %v984, %v984
        %v1038 = vunpack.c.l.s4 1966171168
        %v1039 = vunpack.c.0.s8 %v1038
        %v1040 = vlaneseq
        %v1041 = vshrl.u32 %v1040, 7
        %v1042 = vsub.s32 %v1039, %v1041
        %v1043 = vrot.slane %v984, %v1042
        %v1045 = vunpack.c.l.s4 1966171168
        %v1046 = vunpack.c.0.s8 %v1045
        %v1047 = vlaneseq
        %v1048 = vshrl.u32 %v1047, 7
        %v1049 = vsub.s32 %v1046, %v1048
        %v1050 = vrot.slane %v1036, %v1049
        %v1051 = vcombine.high %v1043, %v1043
        %v1052 = vcombine.high %v1050, %v1050
        %v1054 = vunpack.c.l.s4 1966171168
        %v1055 = vunpack.c.0.s8 %v1054
        %v1056 = vlaneseq
        %v1057 = vshrl.u32 %v1056, 7
        %v1058 = vsub.s32 %v1055, %v1057
        %v1059 = vrot.slane %v1043, %v1058
        %v1061 = vunpack.c.l.s4 1966171168
        %v1062 = vunpack.c.0.s8 %v1061
        %v1063 = vlaneseq
        %v1064 = vshrl.u32 %v1063, 7
        %v1065 = vsub.s32 %v1062, %v1064
        %v1066 = vrot.slane %v1050, %v1065
        %v1068 = vunpack.c.l.s4 1966171168
        %v1069 = vunpack.c.0.s8 %v1068
        %v1070 = vlaneseq
        %v1071 = vshrl.u32 %v1070, 7
        %v1072 = vsub.s32 %v1069, %v1071
        %v1073 = vrot.slane %v1051, %v1072
        %v1075 = vunpack.c.l.s4 1966171168
        %v1076 = vunpack.c.0.s8 %v1075
        %v1077 = vlaneseq
        %v1078 = vshrl.u32 %v1077, 7
        %v1079 = vsub.s32 %v1076, %v1078
        %v1080 = vrot.slane %v1052, %v1079
        %v1081 = vcombine.high %v1059, %v1059
        %v1082 = vcombine.high %v1066, %v1066
        %v1083 = vcombine.high %v1073, %v1073
        %v1084 = vcombine.high %v1080, %v1080
        %vm1085 = vcmask 516096
        %v1088 = vsel %vm1085, %v1010, 4286644096
        %v1090 = vunpack.i.l.bf16 %v1088
        %v1091 = vunpack.i.h.bf16 %v1088
        %v1092 = vmax.f32 %v1090, %v1091
        %v1093 = vrot.slane %v1092, 4
        %v1094 = vmax.f32 %v1092, %v1093
        %v1095 = vrot.slane %v1094, 2
        %v1096 = vmax.f32 %v1094, %v1095
        %v1097 = vrot.slane %v1096, 1
        %v1098 = vmax.f32 %v1096, %v1097
        %v1099 = vpack.i.bf16 %v1098, %v1098
        %v1101 = vsel %vm1085, %v1024, 4286644096
        %v1103 = vunpack.i.l.bf16 %v1101
        %v1104 = vunpack.i.h.bf16 %v1101
        %v1105 = vmax.f32 %v1103, %v1104
        %v1106 = vrot.slane %v1105, 4
        %v1107 = vmax.f32 %v1105, %v1106
        %v1108 = vrot.slane %v1107, 2
        %v1109 = vmax.f32 %v1107, %v1108
        %v1110 = vrot.slane %v1109, 1
        %v1111 = vmax.f32 %v1109, %v1110
        %v1112 = vpack.i.bf16 %v1111, %v1111
        %v1114 = vsel %vm1085, %v1032, 4286644096
        %v1116 = vunpack.i.l.bf16 %v1114
        %v1117 = vunpack.i.h.bf16 %v1114
        %v1118 = vmax.f32 %v1116, %v1117
        %v1119 = vrot.slane %v1118, 4
        %v1120 = vmax.f32 %v1118, %v1119
        %v1121 = vrot.slane %v1120, 2
        %v1122 = vmax.f32 %v1120, %v1121
        %v1123 = vrot.slane %v1122, 1
        %v1124 = vmax.f32 %v1122, %v1123
        %v1125 = vpack.i.bf16 %v1124, %v1124
        %v1127 = vsel %vm1085, %v1034, 4286644096
        %v1129 = vunpack.i.l.bf16 %v1127
        %v1130 = vunpack.i.h.bf16 %v1127
        %v1131 = vmax.f32 %v1129, %v1130
        %v1132 = vrot.slane %v1131, 4
        %v1133 = vmax.f32 %v1131, %v1132
        %v1134 = vrot.slane %v1133, 2
        %v1135 = vmax.f32 %v1133, %v1134
        %v1136 = vrot.slane %v1135, 1
        %v1137 = vmax.f32 %v1135, %v1136
        %v1138 = vpack.i.bf16 %v1137, %v1137
        %v1140 = vsel %vm1085, %v1017, 4286644096
        %v1142 = vunpack.i.l.bf16 %v1140
        %v1143 = vunpack.i.h.bf16 %v1140
        %v1144 = vmax.f32 %v1142, %v1143
        %v1145 = vrot.slane %v1144, 4
        %v1146 = vmax.f32 %v1144, %v1145
        %v1147 = vrot.slane %v1146, 2
        %v1148 = vmax.f32 %v1146, %v1147
        %v1149 = vrot.slane %v1148, 1
        %v1150 = vmax.f32 %v1148, %v1149
        %v1151 = vpack.i.bf16 %v1150, %v1150
        %v1153 = vsel %vm1085, %v1031, 4286644096
        %v1155 = vunpack.i.l.bf16 %v1153
        %v1156 = vunpack.i.h.bf16 %v1153
        %v1157 = vmax.f32 %v1155, %v1156
        %v1158 = vrot.slane %v1157, 4
        %v1159 = vmax.f32 %v1157, %v1158
        %v1160 = vrot.slane %v1159, 2
        %v1161 = vmax.f32 %v1159, %v1160
        %v1162 = vrot.slane %v1161, 1
        %v1163 = vmax.f32 %v1161, %v1162
        %v1164 = vpack.i.bf16 %v1163, %v1163
        %v1166 = vsel %vm1085, %v1033, 4286644096
        %v1168 = vunpack.i.l.bf16 %v1166
        %v1169 = vunpack.i.h.bf16 %v1166
        %v1170 = vmax.f32 %v1168, %v1169
        %v1171 = vrot.slane %v1170, 4
        %v1172 = vmax.f32 %v1170, %v1171
        %v1173 = vrot.slane %v1172, 2
        %v1174 = vmax.f32 %v1172, %v1173
        %v1175 = vrot.slane %v1174, 1
        %v1176 = vmax.f32 %v1174, %v1175
        %v1177 = vpack.i.bf16 %v1176, %v1176
        %v1179 = vsel %vm1085, %v1035, 4286644096
        %v1181 = vunpack.i.l.bf16 %v1179
        %v1182 = vunpack.i.h.bf16 %v1179
        %v1183 = vmax.f32 %v1181, %v1182
        %v1184 = vrot.slane %v1183, 4
        %v1185 = vmax.f32 %v1183, %v1184
        %v1186 = vrot.slane %v1185, 2
        %v1187 = vmax.f32 %v1185, %v1186
        %v1188 = vrot.slane %v1187, 1
        %v1189 = vmax.f32 %v1187, %v1188
        %v1190 = vpack.i.bf16 %v1189, %v1189
        %v1192 = vsel %vm1085, %v1059, 4286644096
        %v1194 = vunpack.i.l.bf16 %v1192
        %v1195 = vunpack.i.h.bf16 %v1192
        %v1196 = vmax.f32 %v1194, %v1195
        %v1197 = vrot.slane %v1196, 4
        %v1198 = vmax.f32 %v1196, %v1197
        %v1199 = vrot.slane %v1198, 2
        %v1200 = vmax.f32 %v1198, %v1199
        %v1201 = vrot.slane %v1200, 1
        %v1202 = vmax.f32 %v1200, %v1201
        %v1203 = vpack.i.bf16 %v1202, %v1202
        %v1205 = vsel %vm1085, %v1073, 4286644096
        %v1207 = vunpack.i.l.bf16 %v1205
        %v1208 = vunpack.i.h.bf16 %v1205
        %v1209 = vmax.f32 %v1207, %v1208
        %v1210 = vrot.slane %v1209, 4
        %v1211 = vmax.f32 %v1209, %v1210
        %v1212 = vrot.slane %v1211, 2
        %v1213 = vmax.f32 %v1211, %v1212
        %v1214 = vrot.slane %v1213, 1
        %v1215 = vmax.f32 %v1213, %v1214
        %v1216 = vpack.i.bf16 %v1215, %v1215
        %v1218 = vsel %vm1085, %v1081, 4286644096
        %v1220 = vunpack.i.l.bf16 %v1218
        %v1221 = vunpack.i.h.bf16 %v1218
        %v1222 = vmax.f32 %v1220, %v1221
        %v1223 = vrot.slane %v1222, 4
        %v1224 = vmax.f32 %v1222, %v1223
        %v1225 = vrot.slane %v1224, 2
        %v1226 = vmax.f32 %v1224, %v1225
        %v1227 = vrot.slane %v1226, 1
        %v1228 = vmax.f32 %v1226, %v1227
        %v1229 = vpack.i.bf16 %v1228, %v1228
        %v1231 = vsel %vm1085, %v1083, 4286644096
        %v1233 = vunpack.i.l.bf16 %v1231
        %v1234 = vunpack.i.h.bf16 %v1231
        %v1235 = vmax.f32 %v1233, %v1234
        %v1236 = vrot.slane %v1235, 4
        %v1237 = vmax.f32 %v1235, %v1236
        %v1238 = vrot.slane %v1237, 2
        %v1239 = vmax.f32 %v1237, %v1238
        %v1240 = vrot.slane %v1239, 1
        %v1241 = vmax.f32 %v1239, %v1240
        %v1242 = vpack.i.bf16 %v1241, %v1241
        %v1244 = vsel %vm1085, %v1066, 4286644096
        %v1246 = vunpack.i.l.bf16 %v1244
        %v1247 = vunpack.i.h.bf16 %v1244
        %v1248 = vmax.f32 %v1246, %v1247
        %v1249 = vrot.slane %v1248, 4
        %v1250 = vmax.f32 %v1248, %v1249
        %v1251 = vrot.slane %v1250, 2
        %v1252 = vmax.f32 %v1250, %v1251
        %v1253 = vrot.slane %v1252, 1
        %v1254 = vmax.f32 %v1252, %v1253
        %v1255 = vpack.i.bf16 %v1254, %v1254
        %v1257 = vsel %vm1085, %v1080, 4286644096
        %v1259 = vunpack.i.l.bf16 %v1257
        %v1260 = vunpack.i.h.bf16 %v1257
        %v1261 = vmax.f32 %v1259, %v1260
        %v1262 = vrot.slane %v1261, 4
        %v1263 = vmax.f32 %v1261, %v1262
        %v1264 = vrot.slane %v1263, 2
        %v1265 = vmax.f32 %v1263, %v1264
        %v1266 = vrot.slane %v1265, 1
        %v1267 = vmax.f32 %v1265, %v1266
        %v1268 = vpack.i.bf16 %v1267, %v1267
        %v1270 = vsel %vm1085, %v1082, 4286644096
        %v1272 = vunpack.i.l.bf16 %v1270
        %v1273 = vunpack.i.h.bf16 %v1270
        %v1274 = vmax.f32 %v1272, %v1273
        %v1275 = vrot.slane %v1274, 4
        %v1276 = vmax.f32 %v1274, %v1275
        %v1277 = vrot.slane %v1276, 2
        %v1278 = vmax.f32 %v1276, %v1277
        %v1279 = vrot.slane %v1278, 1
        %v1280 = vmax.f32 %v1278, %v1279
        %v1281 = vpack.i.bf16 %v1280, %v1280
        %v1283 = vsel %vm1085, %v1084, 4286644096
        %v1285 = vunpack.i.l.bf16 %v1283
        %v1286 = vunpack.i.h.bf16 %v1283
        %v1287 = vmax.f32 %v1285, %v1286
        %v1288 = vrot.slane %v1287, 4
        %v1289 = vmax.f32 %v1287, %v1288
        %v1290 = vrot.slane %v1289, 2
        %v1291 = vmax.f32 %v1289, %v1290
        %v1292 = vrot.slane %v1291, 1
        %v1293 = vmax.f32 %v1291, %v1292
        %v1294 = vpack.i.bf16 %v1293, %v1293
        %v1295 = vld [vmem:[#allocation5] sm:$0xf]
        %v1296 = vld [vmem:[#allocation5 + $0x4] sm:$0xf]
        %v1297 = vld [vmem:[#allocation5 + $0x8] sm:$0xf]
        %v1298 = vld [vmem:[#allocation5 + $0xc] sm:$0xf]
        %v1299 = vld [vmem:[#allocation5 + $0x10] sm:$0xf]
        %v1300 = vld [vmem:[#allocation5 + $0x14] sm:$0xf]
        %v1301 = vld [vmem:[#allocation5 + $0x18] sm:$0xf]
        %v1302 = vld [vmem:[#allocation5 + $0x1c] sm:$0xf]
        %v1303 = vld [vmem:[#allocation5 + $0x20] sm:$0xf]
        %v1304 = vld [vmem:[#allocation5 + $0x24] sm:$0xf]
        %v1305 = vld [vmem:[#allocation5 + $0x28] sm:$0xf]
        %v1306 = vld [vmem:[#allocation5 + $0x2c] sm:$0xf]
        %v1307 = vld [vmem:[#allocation5 + $0x30] sm:$0xf]
        %v1308 = vld [vmem:[#allocation5 + $0x34] sm:$0xf]
        %v1309 = vld [vmem:[#allocation5 + $0x38] sm:$0xf]
        %v1310 = vld [vmem:[#allocation5 + $0x3c] sm:$0xf]
        %v1311 = vld [vmem:[#allocation5 + $0x40] sm:$0xf]
        %v1312 = vld [vmem:[#allocation5 + $0x44] sm:$0xf]
        %v1313 = vld [vmem:[#allocation5 + $0x48] sm:$0xf]
        %v1314 = vld [vmem:[#allocation5 + $0x4c] sm:$0xf]
        %v1315 = vld [vmem:[#allocation5 + $0x50] sm:$0xf]
        %v1316 = vld [vmem:[#allocation5 + $0x54] sm:$0xf]
        %v1317 = vld [vmem:[#allocation5 + $0x58] sm:$0xf]
        %v1318 = vld [vmem:[#allocation5 + $0x5c] sm:$0xf]
        %v1319 = vld [vmem:[#allocation7] sm:$0x1]
        %v1335 = vunpack.c.l.b16 %v1099
        %v1336 = vunpack.c.l.b16 %v1112
        %v1337 = vunpack.c.l.b16 %v1125
        %v1338 = vunpack.c.l.b16 %v1138
        %v1339 = vunpack.c.l.b16 %v1151
        %v1340 = vunpack.c.l.b16 %v1164
        %v1341 = vunpack.c.l.b16 %v1177
        %v1342 = vunpack.c.l.b16 %v1190
        %v1343 = vunpack.c.l.b16 %v1203
        %v1344 = vunpack.c.l.b16 %v1216
        %v1345 = vunpack.c.l.b16 %v1229
        %v1346 = vunpack.c.l.b16 %v1242
        %v1347 = vunpack.c.l.b16 %v1255
        %v1348 = vunpack.c.l.b16 %v1268
        %v1349 = vunpack.c.l.b16 %v1281
        %vm1350 = vcmask 1042434
        %v1351 = vsel %vm1350, %v1336, %v1335
        %vm1352 = vcmask 1043459
        %v1353 = vsel %vm1352, %v1337, %v1351
        %vm1354 = vcmask 1044484
        %v1355 = vsel %vm1354, %v1338, %v1353
        %vm1356 = vcmask 1045509
        %v1357 = vsel %vm1356, %v1339, %v1355
        %vm1358 = vcmask 1046534
        %v1359 = vsel %vm1358, %v1340, %v1357
        %vm1360 = vcmask 1047559
        %v1361 = vsel %vm1360, %v1341, %v1359
        %vm1362 = vcmask 1041409
        %v1363 = vsel %vm1362, %v1343, %v1342
        %v1364 = vsel %vm1350, %v1344, %v1363
        %v1365 = vsel %vm1352, %v1345, %v1364
        %v1366 = vsel %vm1354, %v1346, %v1365
        %v1367 = vsel %vm1356, %v1347, %v1366
        %v1368 = vsel %vm1358, %v1348, %v1367
        %v1369 = vsel %vm1360, %v1349, %v1368
        %v1370 = vpack.c.b16 %v1369, %v1361
        %vm1372 = vcmask 1040384
        %vm1373 = vsmask.f32 256
        %vm1374 = vmand %vm1372, %vm1373
        %v1375 = vsel %vm1374, 0, %v1370
        %v1377 = vunpack.c.l.b16 %v1294
        %v1378 = vsel %vm1362, %v1337, %v1336
        %v1379 = vsel %vm1350, %v1338, %v1378
        %v1380 = vsel %vm1352, %v1339, %v1379
        %v1381 = vsel %vm1354, %v1340, %v1380
        %v1382 = vsel %vm1356, %v1341, %v1381
        %v1383 = vsel %vm1358, %v1342, %v1382
        %v1384 = vsel %vm1360, %v1343, %v1383
        %v1385 = vsel %vm1362, %v1345, %v1344
        %v1386 = vsel %vm1350, %v1346, %v1385
        %v1387 = vsel %vm1352, %v1347, %v1386
        %v1388 = vsel %vm1354, %v1348, %v1387
        %v1389 = vsel %vm1356, %v1349, %v1388
        %v1390 = vsel %vm1358, %v1377, %v1389
        %v1391 = vpack.c.b16 %v1390, %v1384
        %vm1393 = vcmask 1047552
        %vm1394 = vsmask.f32 7424
        %vm1395 = vmand %vm1393, %vm1394
        %v1396 = vsel %vm1395, %v1391, 0
        %vm1397 = vcmp.lt.s32.totalorder %v577, 0
        %v1398 = vsub.s32 0, %v577
        %v1399 = vsel %vm1397, %v1398, %v577
        %v1400 = vshrl.u32 %v1399, 3
        %v1401 = vand.u32 %v1399, 7
        %v1402 = vsub.s32 0, %v1401
        %v1403 = vsel %vm1397, %v1402, %v1401
        %vm1404 = vcmp.lt.s32.totalorder %v578, 0
        %v1405 = vsub.s32 0, %v578
        %v1406 = vsel %vm1404, %v1405, %v578
        %v1407 = vshrl.u32 %v1406, 3
        %v1408 = vand.u32 %v1406, 7
        %v1409 = vsub.s32 0, %v1408
        %v1410 = vsel %vm1404, %v1409, %v1408
        %vm1411 = vcmp.ne.s32.totalorder %v1403, 0
        %vm1412 = vcmp.ne.s32.totalorder %v1410, 0
        %vm1413 = vcmp.lt.s32.totalorder %v1403, 0
        %vm1414 = vcmp.lt.s32.totalorder %v1410, 0
        %vm1415 = vmand %vm1413, %vm1411
        %vm1416 = vmand %vm1414, %vm1412
        %v1417 = vadd.s32 %v1403, 8
        %v1418 = vadd.s32 %v1410, 8
        %v1419 = vsel %vm1415, %v1417, %v1403
        %v1420 = vsel %vm1416, %v1418, %v1410
        %vm1421 = vcmp.gt.s32.totalorder %v1419, 0
        %vm1422 = vcmp.gt.s32.totalorder %v1420, 0
        %v1423 = vsel %vm1421, 1, 0
        %v1424 = vsel %vm1422, 1, 0
        %vm1425 = vcmp.eq.s32.totalorder %v1423, 1
        %vm1426 = vcmp.eq.s32.totalorder %v1424, 1
        %vm1427 = vmpackc.low %vm1425, %vm1425
        %vm1428 = vmpackc.low %vm1426, %vm1426
        %v1429 = vsel %vm1427, 65537, 0
        %v1430 = vsel %vm1428, 65537, 0
        %v1431 = vunpack.c.l.b16 %v1429
        %v1432 = vunpack.c.l.b16 %v1430
        %v1433 = vpack.c.b16 %v1432, %v1431
        %vm1434 = vcmp.ne.s16.totalorder %v1433, 0
        %v1435 = vsel %vm1434, %v1375, 0
        %vm1436 = vcmp.lt.s32.totalorder %v1419, 7
        %vm1437 = vcmp.lt.s32.totalorder %v1420, 7
        %v1438 = vsel %vm1436, 1, 0
        %v1439 = vsel %vm1437, 1, 0
        %vm1440 = vcmp.eq.s32.totalorder %v1438, 1
        %vm1441 = vcmp.eq.s32.totalorder %v1439, 1
        %vm1442 = vmpackc.low %vm1440, %vm1440
        %vm1443 = vmpackc.low %vm1441, %vm1441
        %v1444 = vsel %vm1442, 65537, 0
        %v1445 = vsel %vm1443, 65537, 0
        %v1446 = vunpack.c.l.b16 %v1444
        %v1447 = vunpack.c.l.b16 %v1445
        %v1448 = vpack.c.b16 %v1447, %v1446
        %vm1449 = vcmp.ne.s16.totalorder %v1448, 0
        %v1450 = vsel %vm1449, %v1396, 0
        %v1451 = vsel %vm1362, %v1336, %v1335
        %v1452 = vsel %vm1350, %v1337, %v1451
        %v1453 = vsel %vm1352, %v1338, %v1452
        %v1454 = vsel %vm1354, %v1339, %v1453
        %v1455 = vsel %vm1356, %v1340, %v1454
        %v1456 = vsel %vm1358, %v1341, %v1455
        %v1457 = vsel %vm1360, %v1342, %v1456
        %v1458 = vsel %vm1362, %v1344, %v1343
        %v1459 = vsel %vm1350, %v1345, %v1458
        %v1460 = vsel %vm1352, %v1346, %v1459
        %v1461 = vsel %vm1354, %v1347, %v1460
        %v1462 = vsel %vm1356, %v1348, %v1461
        %v1463 = vsel %vm1358, %v1349, %v1462
        %v1464 = vsel %vm1360, %v1377, %v1463
        %v1465 = vpack.c.b16 %v1464, %v1457
        %1466 = vrot.lane.b32.xlu0 %v1465, 64
        %v1467 = vpop.permute.xlu0 %1466
        %vm1468 = vcmask 523264
        %v1471 = vsel %vm1468, %v1435, %v1467
        %v1474 = vlaneseq
        %v1475 = vshrl.u32 %v1474, 7
        %v1476 = vsub.s32 0, %v1475
        %v1477 = vrot.slane %v1319, %v1476
        %v1503 = vunpack.c.l.b16 %v1295
        %v1504 = vunpack.c.l.b16 %v1296
        %v1505 = vunpack.c.l.b16 %v1297
        %v1506 = vunpack.c.l.b16 %v1298
        %v1507 = vunpack.c.l.b16 %v1299
        %v1508 = vunpack.c.l.b16 %v1300
        %v1509 = vunpack.c.l.b16 %v1301
        %v1510 = vunpack.c.l.b16 %v1302
        %v1511 = vunpack.c.l.b16 %v1303
        %v1512 = vunpack.c.l.b16 %v1304
        %v1513 = vunpack.c.l.b16 %v1305
        %v1514 = vunpack.c.l.b16 %v1306
        %v1515 = vunpack.c.l.b16 %v1307
        %v1516 = vunpack.c.l.b16 %v1308
        %v1517 = vunpack.c.l.b16 %v1309
        %v1518 = vunpack.c.l.b16 %v1310
        %v1519 = vunpack.c.l.b16 %v1311
        %v1520 = vunpack.c.l.b16 %v1312
        %v1521 = vunpack.c.l.b16 %v1313
        %v1522 = vunpack.c.l.b16 %v1314
        %v1523 = vunpack.c.l.b16 %v1315
        %v1524 = vunpack.c.l.b16 %v1316
        %v1525 = vunpack.c.l.b16 %v1317
        %v1526 = vunpack.c.l.b16 %v1318
        %v1527 = vpack.c.b16 %v1504, %v1503
        %v1528 = vpack.c.b16 %v1506, %v1505
        %v1529 = vpack.c.b16 %v1508, %v1507
        %v1530 = vpack.c.b16 %v1510, %v1509
        %v1531 = vpack.c.b16 %v1512, %v1511
        %v1532 = vpack.c.b16 %v1514, %v1513
        %v1533 = vpack.c.b16 %v1516, %v1515
        %v1534 = vpack.c.b16 %v1518, %v1517
        %v1535 = vpack.c.b16 %v1520, %v1519
        %v1536 = vpack.c.b16 %v1522, %v1521
        %v1537 = vpack.c.b16 %v1524, %v1523
        %v1538 = vpack.c.b16 %v1526, %v1525
        %v1552 = vsel %vm1468, %v1450, 0
        %1554 = vmatprep.subr.bf16.mxu0 0
        %1555 = vmatpush1.bf16.msra.mxu0 %v1527
        %1556 = vmatprep.subr.bf16.mxu0 0
        %1557 = vmatpush1.bf16.msra.mxu0 %v1528
        %1558 = vmatprep.subr.bf16.mxu0 0
        %1559 = vmatpush1.bf16.msra.mxu0 %v1529
        %1560 = vmatprep.subr.bf16.mxu0 0
        %1561 = vmatpush1.bf16.msra.mxu0 %v1530
        %1562 = vmatprep.subr.bf16.mxu0 0
        %1563 = vmatpush1.bf16.msra.mxu0 %v1531
        %1564 = vmatprep.subr.bf16.mxu0 0
        %1565 = vmatpush1.bf16.msra.mxu0 %v1532
        %1566 = vmatprep.subr.bf16.mxu0 0
        %1567 = vmatpush1.bf16.msra.mxu0 %v1533
        %1568 = vmatprep.subr.bf16.mxu0 0
        %1569 = vmatpush1.bf16.msra.mxu0 %v1534
        %1570 = vmatprep.subr.bf16.mxu0 0
        %1571 = vmatpush1.bf16.msra.mxu0 %v1535
        %1572 = vmatprep.subr.bf16.mxu0 0
        %1573 = vmatpush1.bf16.msra.mxu0 %v1536
        %1574 = vmatprep.subr.bf16.mxu0 0
        %1575 = vmatpush1.bf16.msra.mxu0 %v1537
        %1576 = vmatprep.subr.bf16.mxu0 0
        %1577 = vmatpush1.bf16.msra.mxu0 %v1538
        %1578 = vmatprep.subr.bf16.mxu0 0
        %1579 = vmatpush1.bf16.msra.mxu0 0
        %1580 = vmatprep.subr.bf16.mxu0 0
        %1581 = vmatpush1.bf16.msra.mxu0 0
        %1582 = vmatprep.subr.bf16.mxu0 0
        %1583 = vmatpush1.bf16.msra.mxu0 0
        %1584 = vmatprep.subr.bf16.mxu0 0
        %1585 = vmatpush1.bf16.msra.mxu0 0
        %1586 = vmatprep.mubr.bf16.mxu0 %v1552
        %1587 = vmatmul.mubr.bf16.gmra.mrb[0].mxu0 %v1471
        %v1588 = vpop.f32.mrb[0].mxu0
        %v1589 = vadd.f32 %v1477, %v1588
        %v1590 = vpop.f32.mrb[0].mxu0
        %v1591 = vpop.f32.mrb[0].mxu0
        %v1592 = vadd.f32 %v1477, %v1591
        %v1593 = vpop.f32.mrb[0].mxu0
        %1594 = vdwg.mxu0
        %v1595 = vmax.f32 %v1589, 0.0
        %v1596 = vmax.f32 %v1592, 0.0
        %v1597 = vpack.c.bf16 %v1596, %v1595
        %v1599 = vcombine.high %v1597, %v1597
        %v1601 = vunpack.c.l.s4 1966171168
        %v1602 = vunpack.c.0.s8 %v1601
        %v1603 = vlaneseq
        %v1604 = vshrl.u32 %v1603, 7
        %v1605 = vsub.s32 %v1602, %v1604
        %v1606 = vrot.slane %v1597, %v1605
        %v1608 = vunpack.c.l.s4 1966171168
        %v1609 = vunpack.c.0.s8 %v1608
        %v1610 = vlaneseq
        %v1611 = vshrl.u32 %v1610, 7
        %v1612 = vsub.s32 %v1609, %v1611
        %v1613 = vrot.slane %v1599, %v1612
        %v1614 = vcombine.high %v1606, %v1606
        %v1615 = vcombine.high %v1613, %v1613
        %v1617 = vunpack.c.l.s4 1966171168
        %v1618 = vunpack.c.0.s8 %v1617
        %v1619 = vlaneseq
        %v1620 = vshrl.u32 %v1619, 7
        %v1621 = vsub.s32 %v1618, %v1620
        %v1622 = vrot.slane %v1606, %v1621
        %v1624 = vunpack.c.l.s4 1966171168
        %v1625 = vunpack.c.0.s8 %v1624
        %v1626 = vlaneseq
        %v1627 = vshrl.u32 %v1626, 7
        %v1628 = vsub.s32 %v1625, %v1627
        %v1629 = vrot.slane %v1613, %v1628
        %v1631 = vunpack.c.l.s4 1966171168
        %v1632 = vunpack.c.0.s8 %v1631
        %v1633 = vlaneseq
        %v1634 = vshrl.u32 %v1633, 7
        %v1635 = vsub.s32 %v1632, %v1634
        %v1636 = vrot.slane %v1614, %v1635
        %v1638 = vunpack.c.l.s4 1966171168
        %v1639 = vunpack.c.0.s8 %v1638
        %v1640 = vlaneseq
        %v1641 = vshrl.u32 %v1640, 7
        %v1642 = vsub.s32 %v1639, %v1641
        %v1643 = vrot.slane %v1615, %v1642
        %v1644 = vcombine.high %v1622, %v1622
        %v1645 = vcombine.high %v1629, %v1629
        %v1646 = vcombine.high %v1636, %v1636
        %v1647 = vcombine.high %v1643, %v1643
        %v1649 = vsel %vm550, %v1622, 4286644096
        %v1651 = vunpack.i.l.bf16 %v1649
        %v1652 = vunpack.i.h.bf16 %v1649
        %v1653 = vmax.f32 %v1651, %v1652
        %v1654 = vrot.slane %v1653, 4
        %v1655 = vmax.f32 %v1653, %v1654
        %v1656 = vrot.slane %v1655, 2
        %v1657 = vmax.f32 %v1655, %v1656
        %v1658 = vrot.slane %v1657, 1
        %v1659 = vmax.f32 %v1657, %v1658
        %v1660 = vpack.i.bf16 %v1659, %v1659
        %v1662 = vsel %vm550, %v1636, 4286644096
        %v1664 = vunpack.i.l.bf16 %v1662
        %v1665 = vunpack.i.h.bf16 %v1662
        %v1666 = vmax.f32 %v1664, %v1665
        %v1667 = vrot.slane %v1666, 4
        %v1668 = vmax.f32 %v1666, %v1667
        %v1669 = vrot.slane %v1668, 2
        %v1670 = vmax.f32 %v1668, %v1669
        %v1671 = vrot.slane %v1670, 1
        %v1672 = vmax.f32 %v1670, %v1671
        %v1673 = vpack.i.bf16 %v1672, %v1672
        %v1675 = vsel %vm550, %v1644, 4286644096
        %v1677 = vunpack.i.l.bf16 %v1675
        %v1678 = vunpack.i.h.bf16 %v1675
        %v1679 = vmax.f32 %v1677, %v1678
        %v1680 = vrot.slane %v1679, 4
        %v1681 = vmax.f32 %v1679, %v1680
        %v1682 = vrot.slane %v1681, 2
        %v1683 = vmax.f32 %v1681, %v1682
        %v1684 = vrot.slane %v1683, 1
        %v1685 = vmax.f32 %v1683, %v1684
        %v1686 = vpack.i.bf16 %v1685, %v1685
        %v1688 = vsel %vm550, %v1646, 4286644096
        %v1690 = vunpack.i.l.bf16 %v1688
        %v1691 = vunpack.i.h.bf16 %v1688
        %v1692 = vmax.f32 %v1690, %v1691
        %v1693 = vrot.slane %v1692, 4
        %v1694 = vmax.f32 %v1692, %v1693
        %v1695 = vrot.slane %v1694, 2
        %v1696 = vmax.f32 %v1694, %v1695
        %v1697 = vrot.slane %v1696, 1
        %v1698 = vmax.f32 %v1696, %v1697
        %v1699 = vpack.i.bf16 %v1698, %v1698
        %v1701 = vsel %vm550, %v1629, 4286644096
        %v1703 = vunpack.i.l.bf16 %v1701
        %v1704 = vunpack.i.h.bf16 %v1701
        %v1705 = vmax.f32 %v1703, %v1704
        %v1706 = vrot.slane %v1705, 4
        %v1707 = vmax.f32 %v1705, %v1706
        %v1708 = vrot.slane %v1707, 2
        %v1709 = vmax.f32 %v1707, %v1708
        %v1710 = vrot.slane %v1709, 1
        %v1711 = vmax.f32 %v1709, %v1710
        %v1712 = vpack.i.bf16 %v1711, %v1711
        %v1714 = vsel %vm550, %v1643, 4286644096
        %v1716 = vunpack.i.l.bf16 %v1714
        %v1717 = vunpack.i.h.bf16 %v1714
        %v1718 = vmax.f32 %v1716, %v1717
        %v1719 = vrot.slane %v1718, 4
        %v1720 = vmax.f32 %v1718, %v1719
        %v1721 = vrot.slane %v1720, 2
        %v1722 = vmax.f32 %v1720, %v1721
        %v1723 = vrot.slane %v1722, 1
        %v1724 = vmax.f32 %v1722, %v1723
        %v1725 = vpack.i.bf16 %v1724, %v1724
        %v1727 = vsel %vm550, %v1645, 4286644096
        %v1729 = vunpack.i.l.bf16 %v1727
        %v1730 = vunpack.i.h.bf16 %v1727
        %v1731 = vmax.f32 %v1729, %v1730
        %v1732 = vrot.slane %v1731, 4
        %v1733 = vmax.f32 %v1731, %v1732
        %v1734 = vrot.slane %v1733, 2
        %v1735 = vmax.f32 %v1733, %v1734
        %v1736 = vrot.slane %v1735, 1
        %v1737 = vmax.f32 %v1735, %v1736
        %v1738 = vpack.i.bf16 %v1737, %v1737
        %v1740 = vsel %vm550, %v1647, 4286644096
        %v1742 = vunpack.i.l.bf16 %v1740
        %v1743 = vunpack.i.h.bf16 %v1740
        %v1744 = vmax.f32 %v1742, %v1743
        %v1745 = vrot.slane %v1744, 4
        %v1746 = vmax.f32 %v1744, %v1745
        %v1747 = vrot.slane %v1746, 2
        %v1748 = vmax.f32 %v1746, %v1747
        %v1749 = vrot.slane %v1748, 1
        %v1750 = vmax.f32 %v1748, %v1749
        %v1751 = vpack.i.bf16 %v1750, %v1750
        %v1752 = vld [vmem:[#allocation8] sm:$0xff]
        %v1753 = vld [vmem:[#allocation8 + $0x8] sm:$0xff]
        %v1754 = vld [vmem:[#allocation8 + $0x10] sm:$0xff]
        %v1755 = vld [vmem:[#allocation8 + $0x18] sm:$0xff]
        %v1756 = vld [vmem:[#allocation8 + $0x20] sm:$0xff]
        %v1757 = vld [vmem:[#allocation8 + $0x28] sm:$0xff]
        %v1758 = vld [vmem:[#allocation8 + $0x30] sm:$0xff]
        %v1759 = vld [vmem:[#allocation8 + $0x38] sm:$0xff]
        %v1760 = vld [vmem:[#allocation8 + $0x40] sm:$0xff]
        %v1761 = vld [vmem:[#allocation8 + $0x48] sm:$0xff]
        %v1762 = vld [vmem:[#allocation8 + $0x50] sm:$0xff]
        %v1763 = vld [vmem:[#allocation8 + $0x58] sm:$0xff]
        %v1764 = vld [vmem:[#allocation8 + $0x60] sm:$0xff]
        %v1765 = vld [vmem:[#allocation8 + $0x68] sm:$0xff]
        %v1766 = vld [vmem:[#allocation8 + $0x70] sm:$0xff]
        %v1767 = vld [vmem:[#allocation8 + $0x78] sm:$0xff]
        %v1768 = vld [vmem:[#allocation8 + $0x80] sm:$0xff]
        %v1769 = vld [vmem:[#allocation8 + $0x88] sm:$0xff]
        %v1770 = vld [vmem:[#allocation8 + $0x90] sm:$0xff]
        %v1771 = vld [vmem:[#allocation8 + $0x98] sm:$0xff]
        %v1772 = vld [vmem:[#allocation8 + $0xa0] sm:$0xff]
        %v1773 = vld [vmem:[#allocation8 + $0xa8] sm:$0xff]
        %v1774 = vld [vmem:[#allocation8 + $0xb0] sm:$0xff]
        %v1775 = vld [vmem:[#allocation8 + $0xb8] sm:$0xff]
        %v1776 = vld [vmem:[#allocation8 + $0xc0] sm:$0xff]
        %v1777 = vld [vmem:[#allocation8 + $0xc8] sm:$0xff]
        %v1778 = vld [vmem:[#allocation8 + $0xd0] sm:$0xff]
        %v1779 = vld [vmem:[#allocation8 + $0xd8] sm:$0xff]
        %v1780 = vld [vmem:[#allocation8 + $0xe0] sm:$0xff]
        %v1781 = vld [vmem:[#allocation8 + $0xe8] sm:$0xff]
        %v1782 = vld [vmem:[#allocation8 + $0xf0] sm:$0xff]
        %v1783 = vld [vmem:[#allocation8 + $0xf8] sm:$0xff]
        %v1784 = vld [vmem:[#allocation8 + $0x100] sm:$0xff]
        %v1785 = vld [vmem:[#allocation8 + $0x108] sm:$0xff]
        %v1786 = vld [vmem:[#allocation8 + $0x110] sm:$0xff]
        %v1787 = vld [vmem:[#allocation8 + $0x118] sm:$0xff]
        %v1788 = vld [vmem:[#allocation8 + $0x120] sm:$0xff]
        %v1789 = vld [vmem:[#allocation8 + $0x128] sm:$0xff]
        %v1790 = vld [vmem:[#allocation8 + $0x130] sm:$0xff]
        %v1791 = vld [vmem:[#allocation8 + $0x138] sm:$0xff]
        %v1792 = vld [vmem:[#allocation8 + $0x140] sm:$0xff]
        %v1793 = vld [vmem:[#allocation8 + $0x148] sm:$0xff]
        %v1794 = vld [vmem:[#allocation8 + $0x150] sm:$0xff]
        %v1795 = vld [vmem:[#allocation8 + $0x158] sm:$0xff]
        %v1796 = vld [vmem:[#allocation8 + $0x160] sm:$0xff]
        %v1797 = vld [vmem:[#allocation8 + $0x168] sm:$0xff]
        %v1798 = vld [vmem:[#allocation8 + $0x170] sm:$0xff]
        %v1799 = vld [vmem:[#allocation8 + $0x178] sm:$0xff]
        %v1800 = vld [vmem:[%s6] sm:$0x3]
        %v1808 = vunpack.c.l.b16 %v1660
        %v1809 = vunpack.c.l.b16 %v1673
        %v1810 = vunpack.c.l.b16 %v1686
        %v1811 = vunpack.c.l.b16 %v1699
        %v1812 = vunpack.c.l.b16 %v1712
        %v1813 = vunpack.c.l.b16 %v1725
        %v1814 = vunpack.c.l.b16 %v1738
        %v1815 = vsel %vm1350, %v1809, %v1808
        %v1816 = vsel %vm1352, %v1810, %v1815
        %v1817 = vsel %vm1354, %v1811, %v1816
        %v1818 = vsel %vm1356, %v1812, %v1817
        %v1819 = vsel %vm1358, %v1813, %v1818
        %v1820 = vsel %vm1360, %v1814, %v1819
        %v1821 = vpack.c.b16 %v1820, %v1820
        %v1823 = vsel %vm1374, 0, %v1821
        %v1825 = vunpack.c.l.b16 %v1751
        %v1826 = vsel %vm1362, %v1810, %v1809
        %v1827 = vsel %vm1350, %v1811, %v1826
        %v1828 = vsel %vm1352, %v1812, %v1827
        %v1829 = vsel %vm1354, %v1813, %v1828
        %v1830 = vsel %vm1356, %v1814, %v1829
        %v1831 = vsel %vm1358, %v1825, %v1830
        %v1832 = vpack.c.b16 %v1831, %v1831
        %vm1834 = vcmask 1043456
        %vm1835 = vsmask.f32 3328
        %vm1836 = vmand %vm1834, %vm1835
        %v1837 = vsel %vm1836, %v1832, 0
        %vm1838 = vcmp.lt.s32.totalorder %v577, 0
        %v1839 = vsub.s32 0, %v577
        %v1840 = vsel %vm1838, %v1839, %v577
        %v1841 = vshrl.u32 %v1840, 2
        %v1842 = vand.u32 %v1840, 3
        %v1843 = vsub.s32 0, %v1842
        %v1844 = vsel %vm1838, %v1843, %v1842
        %vm1845 = vcmp.ne.s32.totalorder %v1844, 0
        %vm1846 = vcmp.lt.s32.totalorder %v1844, 0
        %vm1847 = vmand %vm1846, %vm1845
        %v1848 = vadd.s32 %v1844, 4
        %v1849 = vsel %vm1847, %v1848, %v1844
        %vm1850 = vcmp.gt.s32.totalorder %v1849, 0
        %v1851 = vsel %vm1850, 1, 0
        %vm1852 = vcmp.eq.s32.totalorder %v1851, 1
        %vm1853 = vmpackc.low %vm1852, %vm1852
        %v1854 = vsel %vm1853, %v1823, 0
        %vm1855 = vcmp.lt.s32.totalorder %v1849, 3
        %v1856 = vsel %vm1855, 1, 0
        %vm1857 = vcmp.eq.s32.totalorder %v1856, 1
        %vm1858 = vmpackc.low %vm1857, %vm1857
        %v1859 = vsel %vm1858, %v1837, 0
        %v1860 = vsel %vm1362, %v1809, %v1808
        %v1861 = vsel %vm1350, %v1810, %v1860
        %v1862 = vsel %vm1352, %v1811, %v1861
        %v1863 = vsel %vm1354, %v1812, %v1862
        %v1864 = vsel %vm1356, %v1813, %v1863
        %v1865 = vsel %vm1358, %v1814, %v1864
        %v1866 = vsel %vm1360, %v1825, %v1865
        %v1867 = vpack.c.b16 %v1866, %v1866
        %v1870 = vlaneseq
        %v1871 = vshrl.u32 %v1870, 7
        %v1872 = vsub.s32 0, %v1871
        %v1873 = vrot.slane %v1800, %v1872
        %v1874 = vlaneseq
        %v1875 = vshrl.u32 %v1874, 7
        %v1876 = vsub.s32 1, %v1875
        %v1877 = vrot.slane %v1800, %v1876
        %v1928 = vunpack.c.l.b16 %v1752
        %v1929 = vunpack.c.h.b16 %v1752
        %v1930 = vunpack.c.l.b16 %v1753
        %v1931 = vunpack.c.h.b16 %v1753
        %v1932 = vunpack.c.l.b16 %v1754
        %v1933 = vunpack.c.h.b16 %v1754
        %v1934 = vunpack.c.l.b16 %v1755
        %v1935 = vunpack.c.h.b16 %v1755
        %v1936 = vunpack.c.l.b16 %v1756
        %v1937 = vunpack.c.h.b16 %v1756
        %v1938 = vunpack.c.l.b16 %v1757
        %v1939 = vunpack.c.h.b16 %v1757
        %v1940 = vunpack.c.l.b16 %v1758
        %v1941 = vunpack.c.h.b16 %v1758
        %v1942 = vunpack.c.l.b16 %v1759
        %v1943 = vunpack.c.h.b16 %v1759
        %v1944 = vunpack.c.l.b16 %v1760
        %v1945 = vunpack.c.h.b16 %v1760
        %v1946 = vunpack.c.l.b16 %v1761
        %v1947 = vunpack.c.h.b16 %v1761
        %v1948 = vunpack.c.l.b16 %v1762
        %v1949 = vunpack.c.h.b16 %v1762
        %v1950 = vunpack.c.l.b16 %v1763
        %v1951 = vunpack.c.h.b16 %v1763
        %v1952 = vunpack.c.l.b16 %v1764
        %v1953 = vunpack.c.h.b16 %v1764
        %v1954 = vunpack.c.l.b16 %v1765
        %v1955 = vunpack.c.h.b16 %v1765
        %v1956 = vunpack.c.l.b16 %v1766
        %v1957 = vunpack.c.h.b16 %v1766
        %v1958 = vunpack.c.l.b16 %v1767
        %v1959 = vunpack.c.h.b16 %v1767
        %v1960 = vunpack.c.l.b16 %v1768
        %v1961 = vunpack.c.h.b16 %v1768
        %v1962 = vunpack.c.l.b16 %v1769
        %v1963 = vunpack.c.h.b16 %v1769
        %v1964 = vunpack.c.l.b16 %v1770
        %v1965 = vunpack.c.h.b16 %v1770
        %v1966 = vunpack.c.l.b16 %v1771
        %v1967 = vunpack.c.h.b16 %v1771
        %v1968 = vunpack.c.l.b16 %v1772
        %v1969 = vunpack.c.h.b16 %v1772
        %v1970 = vunpack.c.l.b16 %v1773
        %v1971 = vunpack.c.h.b16 %v1773
        %v1972 = vunpack.c.l.b16 %v1774
        %v1973 = vunpack.c.h.b16 %v1774
        %v1974 = vunpack.c.l.b16 %v1775
        %v1975 = vunpack.c.h.b16 %v1775
        %v1976 = vunpack.c.l.b16 %v1776
        %v1977 = vunpack.c.h.b16 %v1776
        %v1978 = vunpack.c.l.b16 %v1777
        %v1979 = vunpack.c.h.b16 %v1777
        %v1980 = vunpack.c.l.b16 %v1778
        %v1981 = vunpack.c.h.b16 %v1778
        %v1982 = vunpack.c.l.b16 %v1779
        %v1983 = vunpack.c.h.b16 %v1779
        %v1984 = vunpack.c.l.b16 %v1780
        %v1985 = vunpack.c.h.b16 %v1780
        %v1986 = vunpack.c.l.b16 %v1781
        %v1987 = vunpack.c.h.b16 %v1781
        %v1988 = vunpack.c.l.b16 %v1782
        %v1989 = vunpack.c.h.b16 %v1782
        %v1990 = vunpack.c.l.b16 %v1783
        %v1991 = vunpack.c.h.b16 %v1783
        %v1992 = vunpack.c.l.b16 %v1784
        %v1993 = vunpack.c.h.b16 %v1784
        %v1994 = vunpack.c.l.b16 %v1785
        %v1995 = vunpack.c.h.b16 %v1785
        %v1996 = vunpack.c.l.b16 %v1786
        %v1997 = vunpack.c.h.b16 %v1786
        %v1998 = vunpack.c.l.b16 %v1787
        %v1999 = vunpack.c.h.b16 %v1787
        %v2000 = vunpack.c.l.b16 %v1788
        %v2001 = vunpack.c.h.b16 %v1788
        %v2002 = vunpack.c.l.b16 %v1789
        %v2003 = vunpack.c.h.b16 %v1789
        %v2004 = vunpack.c.l.b16 %v1790
        %v2005 = vunpack.c.h.b16 %v1790
        %v2006 = vunpack.c.l.b16 %v1791
        %v2007 = vunpack.c.h.b16 %v1791
        %v2008 = vunpack.c.l.b16 %v1792
        %v2009 = vunpack.c.h.b16 %v1792
        %v2010 = vunpack.c.l.b16 %v1793
        %v2011 = vunpack.c.h.b16 %v1793
        %v2012 = vunpack.c.l.b16 %v1794
        %v2013 = vunpack.c.h.b16 %v1794
        %v2014 = vunpack.c.l.b16 %v1795
        %v2015 = vunpack.c.h.b16 %v1795
        %v2016 = vunpack.c.l.b16 %v1796
        %v2017 = vunpack.c.h.b16 %v1796
        %v2018 = vunpack.c.l.b16 %v1797
        %v2019 = vunpack.c.h.b16 %v1797
        %v2020 = vunpack.c.l.b16 %v1798
        %v2021 = vunpack.c.h.b16 %v1798
        %v2022 = vunpack.c.l.b16 %v1799
        %v2023 = vunpack.c.h.b16 %v1799
        %v2024 = vpack.c.b16 %v1930, %v1928
        %v2025 = vpack.c.b16 %v1931, %v1929
        %v2026 = vpack.c.b16 %v1934, %v1932
        %v2027 = vpack.c.b16 %v1935, %v1933
        %v2028 = vpack.c.b16 %v1938, %v1936
        %v2029 = vpack.c.b16 %v1939, %v1937
        %v2030 = vpack.c.b16 %v1942, %v1940
        %v2031 = vpack.c.b16 %v1943, %v1941
        %v2032 = vpack.c.b16 %v1946, %v1944
        %v2033 = vpack.c.b16 %v1947, %v1945
        %v2034 = vpack.c.b16 %v1950, %v1948
        %v2035 = vpack.c.b16 %v1951, %v1949
        %v2036 = vpack.c.b16 %v1954, %v1952
        %v2037 = vpack.c.b16 %v1955, %v1953
        %v2038 = vpack.c.b16 %v1958, %v1956
        %v2039 = vpack.c.b16 %v1959, %v1957
        %v2040 = vpack.c.b16 %v1962, %v1960
        %v2041 = vpack.c.b16 %v1963, %v1961
        %v2042 = vpack.c.b16 %v1966, %v1964
        %v2043 = vpack.c.b16 %v1967, %v1965
        %v2044 = vpack.c.b16 %v1970, %v1968
        %v2045 = vpack.c.b16 %v1971, %v1969
        %v2046 = vpack.c.b16 %v1974, %v1972
        %v2047 = vpack.c.b16 %v1975, %v1973
        %v2048 = vpack.c.b16 %v1978, %v1976
        %v2049 = vpack.c.b16 %v1979, %v1977
        %v2050 = vpack.c.b16 %v1982, %v1980
        %v2051 = vpack.c.b16 %v1983, %v1981
        %v2052 = vpack.c.b16 %v1986, %v1984
        %v2053 = vpack.c.b16 %v1987, %v1985
        %v2054 = vpack.c.b16 %v1990, %v1988
        %v2055 = vpack.c.b16 %v1991, %v1989
        %v2056 = vpack.c.b16 %v1994, %v1992
        %v2057 = vpack.c.b16 %v1995, %v1993
        %v2058 = vpack.c.b16 %v1998, %v1996
        %v2059 = vpack.c.b16 %v1999, %v1997
        %v2060 = vpack.c.b16 %v2002, %v2000
        %v2061 = vpack.c.b16 %v2003, %v2001
        %v2062 = vpack.c.b16 %v2006, %v2004
        %v2063 = vpack.c.b16 %v2007, %v2005
        %v2064 = vpack.c.b16 %v2010, %v2008
        %v2065 = vpack.c.b16 %v2011, %v2009
        %v2066 = vpack.c.b16 %v2014, %v2012
        %v2067 = vpack.c.b16 %v2015, %v2013
        %v2068 = vpack.c.b16 %v2018, %v2016
        %v2069 = vpack.c.b16 %v2019, %v2017
        %v2070 = vpack.c.b16 %v2022, %v2020
        %v2071 = vpack.c.b16 %v2023, %v2021
        %2120 = vmatprep.subr.bf16.mxu0 %v2025
        %2121 = vmatpush1.bf16.msra.mxu0 %v2024
        %2122 = vmatprep.subr.bf16.mxu0 %v2027
        %2123 = vmatpush1.bf16.msra.mxu0 %v2026
        %2124 = vmatprep.subr.bf16.mxu0 %v2029
        %2125 = vmatpush1.bf16.msra.mxu0 %v2028
        %2126 = vmatprep.subr.bf16.mxu0 %v2031
        %2127 = vmatpush1.bf16.msra.mxu0 %v2030
        %2128 = vmatprep.subr.bf16.mxu0 %v2033
        %2129 = vmatpush1.bf16.msra.mxu0 %v2032
        %2130 = vmatprep.subr.bf16.mxu0 %v2035
        %2131 = vmatpush1.bf16.msra.mxu0 %v2034
        %2132 = vmatprep.subr.bf16.mxu0 %v2037
        %2133 = vmatpush1.bf16.msra.mxu0 %v2036
        %2134 = vmatprep.subr.bf16.mxu0 %v2039
        %2135 = vmatpush1.bf16.msra.mxu0 %v2038
        %2136 = vmatprep.subr.bf16.mxu0 %v2041
        %2137 = vmatpush1.bf16.msra.mxu0 %v2040
        %2138 = vmatprep.subr.bf16.mxu0 %v2043
        %2139 = vmatpush1.bf16.msra.mxu0 %v2042
        %2140 = vmatprep.subr.bf16.mxu0 %v2045
        %2141 = vmatpush1.bf16.msra.mxu0 %v2044
        %2142 = vmatprep.subr.bf16.mxu0 %v2047
        %2143 = vmatpush1.bf16.msra.mxu0 %v2046
        %2144 = vmatprep.subr.bf16.mxu0 %v2049
        %2145 = vmatpush1.bf16.msra.mxu0 %v2048
        %2146 = vmatprep.subr.bf16.mxu0 %v2051
        %2147 = vmatpush1.bf16.msra.mxu0 %v2050
        %2148 = vmatprep.subr.bf16.mxu0 %v2053
        %2149 = vmatpush1.bf16.msra.mxu0 %v2052
        %2150 = vmatprep.subr.bf16.mxu0 %v2055
        %2151 = vmatpush1.bf16.msra.mxu0 %v2054
        %2152 = vmatprep.mubr.bf16.mxu0 %v1867
        %2153 = vmatmul.mubr.bf16.gmra.mrb[0].mxu0 %v1854
        %v2154 = vpop.f32.mrb[0].mxu0
        %v2155 = vadd.f32 %v1873, %v2154
        %v2156 = vpop.f32.mrb[0].mxu0
        %v2157 = vadd.f32 %v1877, %v2156
        %v2158 = vpop.f32.mrb[0].mxu0
        %v2159 = vpop.f32.mrb[0].mxu0
        %2160 = vdwg.mxu0
        %2161 = vmatprep.subr.bf16.mxu0 %v2057
        %2162 = vmatpush1.bf16.msra.mxu0 %v2056
        %2163 = vmatprep.subr.bf16.mxu0 %v2059
        %2164 = vmatpush1.bf16.msra.mxu0 %v2058
        %2165 = vmatprep.subr.bf16.mxu0 %v2061
        %2166 = vmatpush1.bf16.msra.mxu0 %v2060
        %2167 = vmatprep.subr.bf16.mxu0 %v2063
        %2168 = vmatpush1.bf16.msra.mxu0 %v2062
        %2169 = vmatprep.subr.bf16.mxu0 %v2065
        %2170 = vmatpush1.bf16.msra.mxu0 %v2064
        %2171 = vmatprep.subr.bf16.mxu0 %v2067
        %2172 = vmatpush1.bf16.msra.mxu0 %v2066
        %2173 = vmatprep.subr.bf16.mxu0 %v2069
        %2174 = vmatpush1.bf16.msra.mxu0 %v2068
        %2175 = vmatprep.subr.bf16.mxu0 %v2071
        %2176 = vmatpush1.bf16.msra.mxu0 %v2070
        %2177 = vmatprep.subr.bf16.mxu0 0
        %2178 = vmatpush1.bf16.msra.mxu0 0
        %2179 = vmatprep.subr.bf16.mxu0 0
        %2180 = vmatpush1.bf16.msra.mxu0 0
        %2181 = vmatprep.subr.bf16.mxu0 0
        %2182 = vmatpush1.bf16.msra.mxu0 0
        %2183 = vmatprep.subr.bf16.mxu0 0
        %2184 = vmatpush1.bf16.msra.mxu0 0
        %2185 = vmatprep.subr.bf16.mxu0 0
        %2186 = vmatpush1.bf16.msra.mxu0 0
        %2187 = vmatprep.subr.bf16.mxu0 0
        %2188 = vmatpush1.bf16.msra.mxu0 0
        %2189 = vmatprep.subr.bf16.mxu0 0
        %2190 = vmatpush1.bf16.msra.mxu0 0
        %2191 = vmatprep.subr.bf16.mxu0 0
        %2192 = vmatpush1.bf16.msra.mxu0 0
        %2193 = vmatprep.mubr.bf16.mxu0 0
        %2194 = vmatmul.mubr.bf16.gmra.mrb[0].mxu0 %v1859
        %v2195 = vpop.f32.mrb[0].mxu0
        %v2196 = vadd.f32 %v2155, %v2195
        %v2197 = vpop.f32.mrb[0].mxu0
        %v2198 = vadd.f32 %v2157, %v2197
        %v2199 = vpop.f32.mrb[0].mxu0
        %v2200 = vpop.f32.mrb[0].mxu0
        %2201 = vdwg.mxu0
        %v2202 = vmax.f32 %v2196, 0.0
        %v2203 = vmax.f32 %v2198, 0.0
        %v2204 = vpack.c.bf16 %v2202, %v2202
        %v2205 = vpack.c.bf16 %v2203, %v2203
        %v2206 = vld [vmem:[%s13] sm:$0x1]
        %vm2207 = vcmask 64512
        %v2209 = vsel %vm2207, %v2206, 0
        %v2212 = vsel %vm673, %v2204, 0
        %v2215 = vsel %vm673, %v2205, 0
        %2217 = vmatprep.subr.bf16.mxu0 %v2215
        %2218 = vmatpush1.bf16.msra.mxu0 %v2212
        %2219 = vmatprep.subr.bf16.mxu0 0
        %2220 = vmatpush1.bf16.msra.mxu0 0
        %2221 = vmatprep.subr.bf16.mxu0 0
        %2222 = vmatpush1.bf16.msra.mxu0 0
        %2223 = vmatprep.subr.bf16.mxu0 0
        %2224 = vmatpush1.bf16.msra.mxu0 0
        %2225 = vmatprep.subr.bf16.mxu0 0
        %2226 = vmatpush1.bf16.msra.mxu0 0
        %2227 = vmatprep.subr.bf16.mxu0 0
        %2228 = vmatpush1.bf16.msra.mxu0 0
        %2229 = vmatprep.subr.bf16.mxu0 0
        %2230 = vmatpush1.bf16.msra.mxu0 0
        %2231 = vmatprep.subr.bf16.mxu0 0
        %2232 = vmatpush1.bf16.msra.mxu0 0
        %2233 = vmatprep.subr.bf16.mxu0 0
        %2234 = vmatpush1.bf16.msra.mxu0 0
        %2235 = vmatprep.subr.bf16.mxu0 0
        %2236 = vmatpush1.bf16.msra.mxu0 0
        %2237 = vmatprep.subr.bf16.mxu0 0
        %2238 = vmatpush1.bf16.msra.mxu0 0
        %2239 = vmatprep.subr.bf16.mxu0 0
        %2240 = vmatpush1.bf16.msra.mxu0 0
        %2241 = vmatprep.subr.bf16.mxu0 0
        %2242 = vmatpush1.bf16.msra.mxu0 0
        %2243 = vmatprep.subr.bf16.mxu0 0
        %2244 = vmatpush1.bf16.msra.mxu0 0
        %2245 = vmatprep.subr.bf16.mxu0 0
        %2246 = vmatpush1.bf16.msra.mxu0 0
        %2247 = vmatprep.subr.bf16.mxu0 0
        %2248 = vmatpush1.bf16.msra.mxu0 0
        %2249 = vmatprep.mubr.bf16.mxu0 0
        %2250 = vmatmul.mubr.bf16.gmra.mrb[0].mxu0 %v2209
        %v2251 = vpop.f32.mrb[0].mxu0
        %v2252 = vadd.f32 0.0, %v2251
        %v2253 = vpop.f32.mrb[0].mxu0
        %v2254 = vadd.f32 0.0, %v2253
        %v2255 = vpop.f32.mrb[0].mxu0
        %v2256 = vpop.f32.mrb[0].mxu0
        %2257 = vdwg.mxu0
        %v2258 = vmul.f32 %v2252, 0.25
        %v2259 = vmul.f32 %v2254, 0.25
        %v2260 = vpack.c.bf16 %v2258, %v2258
        %v2261 = vpack.c.bf16 %v2259, %v2259
        %v2262 = vld [vmem:[%s7] sm:$0xf]
        %v2263 = vld [vmem:[%s7 + $0x4] sm:$0xf]
        %v2264 = vld [vmem:[%s7 + $0x8] sm:$0xf]
        %v2265 = vld [vmem:[%s7 + $0xc] sm:$0xf]
        %v2266 = vld [vmem:[%s7 + $0x10] sm:$0xf]
        %v2267 = vld [vmem:[%s7 + $0x14] sm:$0xf]
        %v2268 = vld [vmem:[%s7 + $0x18] sm:$0xf]
        %v2269 = vld [vmem:[%s7 + $0x1c] sm:$0xf]
        %v2270 = vld [vmem:[%s7 + $0x20] sm:$0xf]
        %v2271 = vld [vmem:[%s7 + $0x24] sm:$0xf]
        %v2272 = vld [vmem:[%s7 + $0x28] sm:$0xf]
        %v2273 = vld [vmem:[%s7 + $0x2c] sm:$0xf]
        %v2274 = vld [vmem:[%s7 + $0x30] sm:$0xf]
        %v2275 = vld [vmem:[%s7 + $0x34] sm:$0xf]
        %v2276 = vld [vmem:[%s7 + $0x38] sm:$0xf]
        %v2277 = vld [vmem:[%s7 + $0x3c] sm:$0xf]
        %v2278 = vld [vmem:[%s7 + $0x40] sm:$0xf]
        %v2279 = vld [vmem:[%s7 + $0x44] sm:$0xf]
        %v2280 = vld [vmem:[%s7 + $0x48] sm:$0xf]
        %v2281 = vld [vmem:[%s7 + $0x4c] sm:$0xf]
        %v2282 = vld [vmem:[%s7 + $0x50] sm:$0xf]
        %v2283 = vld [vmem:[%s7 + $0x54] sm:$0xf]
        %v2284 = vld [vmem:[%s7 + $0x58] sm:$0xf]
        %v2285 = vld [vmem:[%s7 + $0x5c] sm:$0xf]
        %v2286 = vld [vmem:[%s7 + $0x60] sm:$0xf]
        %v2287 = vld [vmem:[%s7 + $0x64] sm:$0xf]
        %v2288 = vld [vmem:[%s7 + $0x68] sm:$0xf]
        %v2289 = vld [vmem:[%s7 + $0x6c] sm:$0xf]
        %v2290 = vld [vmem:[%s7 + $0x70] sm:$0xf]
        %v2291 = vld [vmem:[%s7 + $0x74] sm:$0xf]
        %v2292 = vld [vmem:[%s7 + $0x78] sm:$0xf]
        %v2293 = vld [vmem:[%s7 + $0x7c] sm:$0xf]
        %v2294 = vld [vmem:[#allocation10] sm:$0x1]
        %v2296 = vlaneseq
        %v2297 = vshrl.u32 %v2296, 7
        %v2298 = vsub.s32 0, %v2297
        %v2299 = vrot.slane %v2294, %v2298
        %v2333 = vunpack.c.l.b16 %v2262
        %v2334 = vunpack.c.l.b16 %v2263
        %v2335 = vunpack.c.l.b16 %v2264
        %v2336 = vunpack.c.l.b16 %v2265
        %v2337 = vunpack.c.l.b16 %v2266
        %v2338 = vunpack.c.l.b16 %v2267
        %v2339 = vunpack.c.l.b16 %v2268
        %v2340 = vunpack.c.l.b16 %v2269
        %v2341 = vunpack.c.l.b16 %v2270
        %v2342 = vunpack.c.l.b16 %v2271
        %v2343 = vunpack.c.l.b16 %v2272
        %v2344 = vunpack.c.l.b16 %v2273
        %v2345 = vunpack.c.l.b16 %v2274
        %v2346 = vunpack.c.l.b16 %v2275
        %v2347 = vunpack.c.l.b16 %v2276
        %v2348 = vunpack.c.l.b16 %v2277
        %v2349 = vunpack.c.l.b16 %v2278
        %v2350 = vunpack.c.l.b16 %v2279
        %v2351 = vunpack.c.l.b16 %v2280
        %v2352 = vunpack.c.l.b16 %v2281
        %v2353 = vunpack.c.l.b16 %v2282
        %v2354 = vunpack.c.l.b16 %v2283
        %v2355 = vunpack.c.l.b16 %v2284
        %v2356 = vunpack.c.l.b16 %v2285
        %v2357 = vunpack.c.l.b16 %v2286
        %v2358 = vunpack.c.l.b16 %v2287
        %v2359 = vunpack.c.l.b16 %v2288
        %v2360 = vunpack.c.l.b16 %v2289
        %v2361 = vunpack.c.l.b16 %v2290
        %v2362 = vunpack.c.l.b16 %v2291
        %v2363 = vunpack.c.l.b16 %v2292
        %v2364 = vunpack.c.l.b16 %v2293
        %v2365 = vpack.c.b16 %v2334, %v2333
        %v2366 = vpack.c.b16 %v2336, %v2335
        %v2367 = vpack.c.b16 %v2338, %v2337
        %v2368 = vpack.c.b16 %v2340, %v2339
        %v2369 = vpack.c.b16 %v2342, %v2341
        %v2370 = vpack.c.b16 %v2344, %v2343
        %v2371 = vpack.c.b16 %v2346, %v2345
        %v2372 = vpack.c.b16 %v2348, %v2347
        %v2373 = vpack.c.b16 %v2350, %v2349
        %v2374 = vpack.c.b16 %v2352, %v2351
        %v2375 = vpack.c.b16 %v2354, %v2353
        %v2376 = vpack.c.b16 %v2356, %v2355
        %v2377 = vpack.c.b16 %v2358, %v2357
        %v2378 = vpack.c.b16 %v2360, %v2359
        %v2379 = vpack.c.b16 %v2362, %v2361
        %v2380 = vpack.c.b16 %v2364, %v2363
        %2397 = vmatprep.subr.bf16.mxu0 0
        %2398 = vmatpush1.bf16.msra.mxu0 %v2365
        %2399 = vmatprep.subr.bf16.mxu0 0
        %2400 = vmatpush1.bf16.msra.mxu0 %v2366
        %2401 = vmatprep.subr.bf16.mxu0 0
        %2402 = vmatpush1.bf16.msra.mxu0 %v2367
        %2403 = vmatprep.subr.bf16.mxu0 0
        %2404 = vmatpush1.bf16.msra.mxu0 %v2368
        %2405 = vmatprep.subr.bf16.mxu0 0
        %2406 = vmatpush1.bf16.msra.mxu0 %v2369
        %2407 = vmatprep.subr.bf16.mxu0 0
        %2408 = vmatpush1.bf16.msra.mxu0 %v2370
        %2409 = vmatprep.subr.bf16.mxu0 0
        %2410 = vmatpush1.bf16.msra.mxu0 %v2371
        %2411 = vmatprep.subr.bf16.mxu0 0
        %2412 = vmatpush1.bf16.msra.mxu0 %v2372
        %2413 = vmatprep.subr.bf16.mxu0 0
        %2414 = vmatpush1.bf16.msra.mxu0 %v2373
        %2415 = vmatprep.subr.bf16.mxu0 0
        %2416 = vmatpush1.bf16.msra.mxu0 %v2374
        %2417 = vmatprep.subr.bf16.mxu0 0
        %2418 = vmatpush1.bf16.msra.mxu0 %v2375
        %2419 = vmatprep.subr.bf16.mxu0 0
        %2420 = vmatpush1.bf16.msra.mxu0 %v2376
        %2421 = vmatprep.subr.bf16.mxu0 0
        %2422 = vmatpush1.bf16.msra.mxu0 %v2377
        %2423 = vmatprep.subr.bf16.mxu0 0
        %2424 = vmatpush1.bf16.msra.mxu0 %v2378
        %2425 = vmatprep.subr.bf16.mxu0 0
        %2426 = vmatpush1.bf16.msra.mxu0 %v2379
        %2427 = vmatprep.subr.bf16.mxu0 0
        %2428 = vmatpush1.bf16.msra.mxu0 %v2380
        %2429 = vmatprep.mubr.bf16.mxu0 %v2261
        %2430 = vmatmul.mubr.bf16.gmra.mrb[0].mxu0 %v2260
        %v2431 = vpop.f32.mrb[0].mxu0
        %v2432 = vadd.f32 %v2299, %v2431
        %v2433 = vpop.f32.mrb[0].mxu0
        %v2434 = vpop.f32.mrb[0].mxu0
        %v2435 = vpop.f32.mrb[0].mxu0
        %2436 = vdwg.mxu0
        %v2437 = vmax.f32 %v2432, 0.0
        %v2438 = vpack.c.bf16 %v2437, %v2437
        %v2439 = vld [vmem:[%s9] sm:$0xf]
        %v2440 = vld [vmem:[%s9 + $0x4] sm:$0xf]
        %v2441 = vld [vmem:[%s9 + $0x8] sm:$0xf]
        %v2442 = vld [vmem:[%s9 + $0xc] sm:$0xf]
        %v2443 = vld [vmem:[%s9 + $0x10] sm:$0xf]
        %v2444 = vld [vmem:[%s9 + $0x14] sm:$0xf]
        %v2445 = vld [vmem:[%s9 + $0x18] sm:$0xf]
        %v2446 = vld [vmem:[%s9 + $0x1c] sm:$0xf]
        %v2447 = vld [vmem:[%s9 + $0x20] sm:$0xf]
        %v2448 = vld [vmem:[%s9 + $0x24] sm:$0xf]
        %v2449 = vld [vmem:[%s9 + $0x28] sm:$0xf]
        %v2450 = vld [vmem:[%s9 + $0x2c] sm:$0xf]
        %v2451 = vld [vmem:[%s9 + $0x30] sm:$0xf]
        %v2452 = vld [vmem:[%s9 + $0x34] sm:$0xf]
        %v2453 = vld [vmem:[%s9 + $0x38] sm:$0xf]
        %v2454 = vld [vmem:[%s9 + $0x3c] sm:$0xf]
        %v2455 = vld [vmem:[%s10] sm:$0x1]
        %v2457 = vlaneseq
        %v2458 = vshrl.u32 %v2457, 7
        %v2459 = vsub.s32 0, %v2458
        %v2460 = vrot.slane %v2455, %v2459
        %v2478 = vunpack.c.l.b16 %v2439
        %v2479 = vunpack.c.l.b16 %v2440
        %v2480 = vunpack.c.l.b16 %v2441
        %v2481 = vunpack.c.l.b16 %v2442
        %v2482 = vunpack.c.l.b16 %v2443
        %v2483 = vunpack.c.l.b16 %v2444
        %v2484 = vunpack.c.l.b16 %v2445
        %v2485 = vunpack.c.l.b16 %v2446
        %v2486 = vunpack.c.l.b16 %v2447
        %v2487 = vunpack.c.l.b16 %v2448
        %v2488 = vunpack.c.l.b16 %v2449
        %v2489 = vunpack.c.l.b16 %v2450
        %v2490 = vunpack.c.l.b16 %v2451
        %v2491 = vunpack.c.l.b16 %v2452
        %v2492 = vunpack.c.l.b16 %v2453
        %v2493 = vunpack.c.l.b16 %v2454
        %v2494 = vpack.c.b16 %v2479, %v2478
        %v2495 = vpack.c.b16 %v2481, %v2480
        %v2496 = vpack.c.b16 %v2483, %v2482
        %v2497 = vpack.c.b16 %v2485, %v2484
        %v2498 = vpack.c.b16 %v2487, %v2486
        %v2499 = vpack.c.b16 %v2489, %v2488
        %v2500 = vpack.c.b16 %v2491, %v2490
        %v2501 = vpack.c.b16 %v2493, %v2492
        %2510 = vmatprep.subr.bf16.mxu0 0
        %2511 = vmatpush1.bf16.msra.mxu0 %v2494
        %2512 = vmatprep.subr.bf16.mxu0 0
        %2513 = vmatpush1.bf16.msra.mxu0 %v2495
        %2514 = vmatprep.subr.bf16.mxu0 0
        %2515 = vmatpush1.bf16.msra.mxu0 %v2496
        %2516 = vmatprep.subr.bf16.mxu0 0
        %2517 = vmatpush1.bf16.msra.mxu0 %v2497
        %2518 = vmatprep.subr.bf16.mxu0 0
        %2519 = vmatpush1.bf16.msra.mxu0 %v2498
        %2520 = vmatprep.subr.bf16.mxu0 0
        %2521 = vmatpush1.bf16.msra.mxu0 %v2499
        %2522 = vmatprep.subr.bf16.mxu0 0
        %2523 = vmatpush1.bf16.msra.mxu0 %v2500
        %2524 = vmatprep.subr.bf16.mxu0 0
        %2525 = vmatpush1.bf16.msra.mxu0 %v2501
        %2526 = vmatprep.subr.bf16.mxu0 0
        %2527 = vmatpush1.bf16.msra.mxu0 0
        %2528 = vmatprep.subr.bf16.mxu0 0
        %2529 = vmatpush1.bf16.msra.mxu0 0
        %2530 = vmatprep.subr.bf16.mxu0 0
        %2531 = vmatpush1.bf16.msra.mxu0 0
        %2532 = vmatprep.subr.bf16.mxu0 0
        %2533 = vmatpush1.bf16.msra.mxu0 0
        %2534 = vmatprep.subr.bf16.mxu0 0
        %2535 = vmatpush1.bf16.msra.mxu0 0
        %2536 = vmatprep.subr.bf16.mxu0 0
        %2537 = vmatpush1.bf16.msra.mxu0 0
        %2538 = vmatprep.subr.bf16.mxu0 0
        %2539 = vmatpush1.bf16.msra.mxu0 0
        %2540 = vmatprep.subr.bf16.mxu0 0
        %2541 = vmatpush1.bf16.msra.mxu0 0
        %2542 = vmatprep.mubr.bf16.mxu0 0
        %2543 = vmatmul.mubr.bf16.gmra.mrb[0].mxu0 %v2438
        %v2544 = vpop.f32.mrb[0].mxu0
        %v2545 = vadd.f32 %v2460, %v2544
        %v2546 = vpop.f32.mrb[0].mxu0
        %v2547 = vpop.f32.mrb[0].mxu0
        %v2548 = vpop.f32.mrb[0].mxu0
        %2549 = vdwg.mxu0
        %v2550 = vmax.f32 %v2545, 0.0
        %v2551 = vpack.c.bf16 %v2550, %v2550
        %v2552 = vld [vmem:[%s11] sm:$0xf]
        %v2553 = vld [vmem:[%s11 + $0x4] sm:$0xf]
        %v2554 = vld [vmem:[%s11 + $0x8] sm:$0xf]
        %v2555 = vld [vmem:[%s11 + $0xc] sm:$0xf]
        %v2556 = vld [vmem:[%s11 + $0x10] sm:$0xf]
        %v2557 = vld [vmem:[%s11 + $0x14] sm:$0xf]
        %v2558 = vld [vmem:[%s11 + $0x18] sm:$0xf]
        %v2559 = vld [vmem:[%s11 + $0x1c] sm:$0xf]
        %v2560 = vld [vmem:[%s12] sm:$0x1]
        %v2562 = vlaneseq
        %v2563 = vshrl.u32 %v2562, 7
        %v2564 = vsub.s32 0, %v2563
        %v2565 = vrot.slane %v2560, %v2564
        %v2575 = vunpack.c.l.b16 %v2552
        %v2576 = vunpack.c.l.b16 %v2553
        %v2577 = vunpack.c.l.b16 %v2554
        %v2578 = vunpack.c.l.b16 %v2555
        %v2579 = vunpack.c.l.b16 %v2556
        %v2580 = vunpack.c.l.b16 %v2557
        %v2581 = vunpack.c.l.b16 %v2558
        %v2582 = vunpack.c.l.b16 %v2559
        %v2583 = vpack.c.b16 %v2576, %v2575
        %v2584 = vpack.c.b16 %v2578, %v2577
        %v2585 = vpack.c.b16 %v2580, %v2579
        %v2586 = vpack.c.b16 %v2582, %v2581
        %v2592 = vsel %vm1468, %v2551, 0
        %2594 = vmatprep.subr.bf16.mxu0 0
        %2595 = vmatpush1.bf16.msra.mxu0 %v2583
        %2596 = vmatprep.subr.bf16.mxu0 0
        %2597 = vmatpush1.bf16.msra.mxu0 %v2584
        %2598 = vmatprep.subr.bf16.mxu0 0
        %2599 = vmatpush1.bf16.msra.mxu0 %v2585
        %2600 = vmatprep.subr.bf16.mxu0 0
        %2601 = vmatpush1.bf16.msra.mxu0 %v2586
        %2602 = vmatprep.subr.bf16.mxu0 0
        %2603 = vmatpush1.bf16.msra.mxu0 0
        %2604 = vmatprep.subr.bf16.mxu0 0
        %2605 = vmatpush1.bf16.msra.mxu0 0
        %2606 = vmatprep.subr.bf16.mxu0 0
        %2607 = vmatpush1.bf16.msra.mxu0 0
        %2608 = vmatprep.subr.bf16.mxu0 0
        %2609 = vmatpush1.bf16.msra.mxu0 0
        %2610 = vmatprep.subr.bf16.mxu0 0
        %2611 = vmatpush1.bf16.msra.mxu0 0
        %2612 = vmatprep.subr.bf16.mxu0 0
        %2613 = vmatpush1.bf16.msra.mxu0 0
        %2614 = vmatprep.subr.bf16.mxu0 0
        %2615 = vmatpush1.bf16.msra.mxu0 0
        %2616 = vmatprep.subr.bf16.mxu0 0
        %2617 = vmatpush1.bf16.msra.mxu0 0
        %2618 = vmatprep.subr.bf16.mxu0 0
        %2619 = vmatpush1.bf16.msra.mxu0 0
        %2620 = vmatprep.subr.bf16.mxu0 0
        %2621 = vmatpush1.bf16.msra.mxu0 0
        %2622 = vmatprep.subr.bf16.mxu0 0
        %2623 = vmatpush1.bf16.msra.mxu0 0
        %2624 = vmatprep.subr.bf16.mxu0 0
        %2625 = vmatpush1.bf16.msra.mxu0 0
        %2626 = vmatprep.mubr.bf16.mxu0 0
        %2627 = vmatmul.mubr.bf16.gmra.mrb[0].mxu0 %v2592
        %v2628 = vpop.f32.mrb[0].mxu0
        %v2629 = vadd.f32 %v2565, %v2628
        %v2630 = vpop.f32.mrb[0].mxu0
        %v2631 = vpop.f32.mrb[0].mxu0
        %v2632 = vpop.f32.mrb[0].mxu0
        %2633 = vdwg.mxu0
        %2634 = vst [vmem:[%s530] sm:$0x3] %v2629
        %s2635 = sand.u32 %s338, 1
        %s2636 = scalar_lea.sflag [#allocation4], %s2635
        %s2637 = sand.u32 %s338, 1
        %s2638 = smul.addr %s2637, 2
        %s2639 = scalar_lea.vmem [#allocation11], %s2638
        // Predicated region
        $region97: #{tpu_custom_call.1} parent=75 // pred_check
          %p2640 = pneg %p348
        $region98: #{tpu_custom_call.1} parent=75 // pred_check_branch
          %2642 = sbr.rel (%p2640) target = $region100
        $region99: #{tpu_custom_call.1} parent=75 // pred_region
          %s2644 = ssub.s32 32, 32
          %2645 = vsyncadd %s2636, %s2644
          %s2646 = smul.addr %s31, 32
          %s2647 = scalar_lea.hbm %s14, %s2646
          %s2649 = sshll.u32 %s2639, 4
          %s2650 = int_to_ptr.vmem [resolvable:$true] %s2649
          %2652 = dma.vmem_to_hbm [thread:$0]  %s2650, 32, %s2647, %s2636
        $region100: #{tpu_custom_call.1} parent=75 // pred_fallthru
          _
      $region76: #{tpu_custom_call.1} parent=5 // pred_fallthru
        _
      %p2653 = scmp.le.s32.totalorder 2, %s26
      // Predicated region
      $region101: #{tpu_custom_call.1} parent=5 // pred_check
        %p2654 = pneg %p2653
      $region102: #{tpu_custom_call.1} parent=5 // pred_check_branch
        %2656 = sbr.rel (%p2654) target = $region104
      $region103: #{tpu_custom_call.1} parent=5 // pred_region
        %s2657 = ssub.s32 %s26, 2
        // Predicated region
        $region105: #{tpu_custom_call.1} parent=103 // pred_check
          %p2658 = pneg %p354
        $region106: #{tpu_custom_call.1} parent=103 // pred_check_branch
          %2660 = sbr.rel (%p2658) target = $region108
        $region107: #{tpu_custom_call.1} parent=103 // pred_region
          %s2661 = sand.u32 %s339, 1
          %s2662 = scalar_lea.sflag [#allocation4], %s2661
          %s2663 = sand.u32 %s339, 1
          %s2664 = smul.addr %s2663, 2
          %s2665 = scalar_lea.vmem [#allocation11], %s2664
          %2666 = dma.done %s2662, 32
        $region108: #{tpu_custom_call.1} parent=103 // pred_fallthru
          _
      $region104: #{tpu_custom_call.1} parent=5 // pred_fallthru
        _
    $region6: #{tpu_custom_call.1} parent=1 // loop_footer
      %s30 = sadd.s32 1, %s26
    $region7: #{tpu_custom_call.1} parent=1 // loop_footer_branch
      %25 = sbr.rel target = $region3
    $region8: #{tpu_custom_call.1} parent=1 // loop_exit
      _
    %2667 = vsyncpa [#allocation3], 1
    %s2668 = scalar_lea.sflag [#allocation3], 1
    %2669 = vsyncpa %s2668, 1
    %2670 = vsyncpa [#allocation6], 1
    %2671 = vsyncpa [#allocation9], 1
    %2672 = vsyncpa [#allocation4], 1
    %s2673 = scalar_lea.sflag [#allocation4], 1
    %2674 = vsyncpa %s2673, 1

</llo_original>
